<compile_context>
chip_gen: v6e
topology: v6e:2x2x1
jax: 0.10.0
libtpu: 0.0.40
codegen_flags: <defaults>
</compile_context>

<pallas_src>
import functools

import jax
import jax.numpy as jnp
from jax import lax
from jax.experimental import pallas as pl
from jax.experimental.pallas import tpu as pltpu

_EPS = 1e-6
_IMG_FEATS = 3072          # 3 * 32 * 32
_IMG_CHUNK = 256           # lane-chunk size for the 3072-wide row reduction
_NUM_PARTIALS = 2          # leading "parallel" grid axis (v7x: one per TC)


def _round_up(x, m):
    return ((x + m - 1) // m) * m


def _default_tile_and_vmem():
    """Generation-aware (batch_tile, vmem_limit_bytes) defaults.

    v5e/v6e (128 MiB VMEM): TB=1024 -> 3 slabs x 12 MiB x 2 buffers = 72 MiB.
    v7x     ( 64 MiB VMEM): TB=512  -> 36 MiB double-buffered.
    Fallback is the v7x-safe config (valid on every generation).
    """
    try:
        vmem_bytes = int(pltpu.get_tpu_info().vmem_capacity_bytes)
    except Exception:
        return 512, 48 * 1024 * 1024
    if vmem_bytes >= 100 * 1024 * 1024:
        return 1024, 96 * 1024 * 1024
    return 512, 48 * 1024 * 1024


def _rowsum_sq_dist(x_ref, y_ref, *, n_feat, chunk):
    """sum((|x - y| + eps)^2, axis=1, keepdims=True), streamed over lane chunks.

    Bounded, unrolled fori_loop keeps the per-chunk (TB, chunk) f32 temps'
    live ranges fixed instead of letting a static Python loop extend them.
    """
    assert n_feat % chunk == 0
    rows = x_ref.shape[0]
    n_chunks = n_feat // chunk

    def body(i, acc):
        c = pl.multiple_of(i * chunk, chunk)
        xc = x_ref[:, pl.ds(c, chunk)].astype(jnp.float32)
        yc = y_ref[:, pl.ds(c, chunk)].astype(jnp.float32)
        d = jnp.abs(xc - yc) + _EPS
        return acc + jnp.sum(d * d, axis=1, keepdims=True)

    return lax.fori_loop(0, n_chunks, body,
                         jnp.zeros((rows, 1), jnp.float32), unroll=True)


def _gen_loss_kernel(gen_ref, anc_ref, neg_ref,
                     posd_ref, gend_ref, ancd_ref,
                     out_ref,
                     *, margin, lambda1, lambda2, batch, tb, steps):
    p = pl.program_id(0)      # partial ("parallel") axis
    j = pl.program_id(1)      # reduction ("arbitrary") axis

    # --- init this partial's resident per-row accumulator block ---
    @pl.when(j == 0)
    def _():
        out_ref[...] = jnp.zeros_like(out_ref)

    n_img = gen_ref.shape[1]

    # --- image-feature squared-L2 distances, shape (TB, 1) ---
    d1 = _rowsum_sq_dist(gen_ref, anc_ref, n_feat=n_img, chunk=_IMG_CHUNK)
    d2 = 0.01 * _rowsum_sq_dist(anc_ref, neg_ref, n_feat=n_img, chunk=_IMG_CHUNK)

    # --- descriptor distances, shape (TB, 1) ---
    posd = posd_ref[...].astype(jnp.float32)
    gend = gend_ref[...].astype(jnp.float32)
    ancd = ancd_ref[...].astype(jnp.float32)
    dp = jnp.abs(posd - ancd) + _EPS
    dn = jnp.abs(gend - ancd) + _EPS
    d_p = jnp.sum(dp * dp, axis=1, keepdims=True)
    d_n = jnp.sum(dn * dn, axis=1, keepdims=True)

    # --- log / hinge math (EUP logs taken directly on the (TB,1) columns) ---
    tmp_d1 = jnp.log(d1 + 0.5)
    tmp_d2 = jnp.log(d2 + 0.5) + 1.0
    tmp1 = jnp.log(d_p + 0.5)
    tmp2 = jnp.log(d_n + 0.5) + 1.0

    dist_hinge = jnp.maximum(tmp2 - margin - tmp1, 0.0)
    gen_loss = tmp_d1 + lambda1 * tmp_d2 + lambda2 * dist_hinge  # (TB, 1)

    # --- mask rows beyond the true batch (ragged edge + clamped duplicate
    #     blocks).  jnp.where is a select, so garbage/NaN in masked rows
    #     cannot propagate. ---
    blk = p * steps + j
    row = blk * tb + lax.broadcasted_iota(jnp.int32, (tb, 1), 0)
    gen_loss = jnp.where(row < batch, gen_loss, 0.0)

    out_ref[...] += gen_loss[None]


def generate_loss(anchor_ori, anchor_d, positive_ori, pos_d,
                  negative_ori, neg_d, generate_ori, gen_d, class_statis,
                  *, margin, lambda1, lambda2, size_average=True,
                  block_rows=None):
    # positive_ori, neg_d, class_statis, size_average are unused by the
    # original forward pass; accepted for interface fidelity.
    del positive_ori, neg_d, class_statis, size_average

    B = generate_ori.shape[0]
    n_img = _IMG_FEATS
    n_desc = anchor_d.shape[1]

    default_tb, vmem_limit = _default_tile_and_vmem()
    if block_rows is None:
        block_rows = default_tb

    # Keep native dtype (bf16 stays bf16) -> kernel casts to f32 after load.
    gen = generate_ori.reshape(B, n_img)
    anc = anchor_ori.reshape(B, n_img)
    neg = negative_ori.reshape(B, n_img)

    # Batch tile: multiple of 8 sublanes, no wrapper-side padding.
    tb = min(int(block_rows), _round_up(B, 8))
    tb = max(8, _round_up(tb, 8))

    n_blocks = pl.cdiv(B, tb)                       # total batch blocks
    num_partials = _NUM_PARTIALS if n_blocks >= 2 else 1
    steps = pl.cdiv(n_blocks, num_partials)         # reduction steps / partial
    grid = (num_partials, steps)

    kernel = functools.partial(
        _gen_loss_kernel,
        margin=float(margin), lambda1=float(lambda1), lambda2=float(lambda2),
        batch=int(B), tb=tb, steps=steps)

    # Block index for this grid point, clamped so the HBM read stays in
    # bounds; the duplicate (clamped) block's rows are masked in-kernel.
    def blk_map(p, j):
        return (jnp.minimum(p * steps + j, n_blocks - 1), 0)

    def img_spec():
        return pl.BlockSpec((tb, n_img), blk_map)

    def desc_spec():
        return pl.BlockSpec((tb, n_desc), blk_map)

    partials = pl.pallas_call(
        kernel,
        out_shape=jax.ShapeDtypeStruct((num_partials, tb, 1), jnp.float32),
        grid=grid,
        in_specs=[img_spec(), img_spec(), img_spec(),
                  desc_spec(), desc_spec(), desc_spec()],
        out_specs=pl.BlockSpec((1, tb, 1), lambda p, j: (p, 0, 0)),
        compiler_params=pltpu.CompilerParams(
            dimension_semantics=("parallel", "arbitrary"),
            vmem_limit_bytes=vmem_limit),
    )(gen, anc, neg, pos_d, gen_d, anchor_d)

    # Tiny final reduction (num_partials * TB elements) + mean over true B.
    return jnp.sum(partials) / B


def _reference_loss(anchor_ori, anchor_d, positive_ori, pos_d,
                    negative_ori, neg_d, generate_ori, gen_d,
                    *, margin, lambda1, lambda2):
    def nd(x1, x2):
        diff = jnp.abs(x1 - x2)
        return jnp.sum((diff + _EPS) ** 2, axis=1, keepdims=True)

    B = generate_ori.shape[0]
    gen = generate_ori.reshape(B, _IMG_FEATS).astype(jnp.float32)
    anc = anchor_ori.reshape(B, _IMG_FEATS).astype(jnp.float32)
    neg = negative_ori.reshape(B, _IMG_FEATS).astype(jnp.float32)
    d1 = nd(gen, anc)
    d2 = 0.01 * nd(anc, neg)
    tmp_d1 = jnp.log(d1 + 0.5)
    tmp_d2 = jnp.log(d2 + 0.5) + 1.0
    d_p = nd(pos_d.astype(jnp.float32), anchor_d.astype(jnp.float32))
    d_n = nd(gen_d.astype(jnp.float32), anchor_d.astype(jnp.float32))
    tmp1 = jnp.log(d_p + 0.5)
    tmp2 = jnp.log(d_n + 0.5) + 1.0
    hinge = jnp.maximum(tmp2 - margin - tmp1, 0.0)
    return jnp.mean(tmp_d1 + lambda1 * tmp_d2 + lambda2 * hinge)


if __name__ == "__main__":
    key = jax.random.PRNGKey(0)
    margin, lambda1, lambda2 = 0.5, 1.0, 1.0

    def run_case(B, block_rows):
        ks = jax.random.split(jax.random.fold_in(key, B), 9)
        anchor_ori = jax.random.normal(ks[0], (B, 3, 32, 32), jnp.float32)
        positive_ori = jax.random.normal(ks[1], (B, 3, 32, 32), jnp.float32)
        negative_ori = jax.random.normal(ks[2], (B, 3, 32, 32), jnp.float32)
        generate_ori = jax.random.normal(ks[3], (B, 3, 32, 32), jnp.float32)
        anchor_d = jax.random.normal(ks[4], (B, 32), jnp.float32)
        pos_d = jax.random.normal(ks[5], (B, 32), jnp.float32)
        neg_d = jax.random.normal(ks[6], (B, 32), jnp.float32)
        gen_d = jax.random.normal(ks[7], (B, 32), jnp.float32)
        class_statis = jax.random.normal(ks[8], (10,), jnp.float32)  # unused

        loss = generate_loss(anchor_ori, anchor_d, positive_ori, pos_d,
                             negative_ori, neg_d, generate_ori, gen_d,
                             class_statis,
                             margin=margin, lambda1=lambda1, lambda2=lambda2,
                             block_rows=block_rows)
        loss = jax.block_until_ready(loss)
        ref = _reference_loss(anchor_ori, anchor_d, positive_ori, pos_d,
                              negative_ori, neg_d, generate_ori, gen_d,
                              margin=margin, lambda1=lambda1, lambda2=lambda2)
        assert jnp.allclose(loss, ref, rtol=1e-5, atol=1e-5), (B, loss, ref)

    # small, single grid step (matches the module's toy usage)
    run_case(B=2, block_rows=None)
    # two partials, ragged edge block (rows 10..15 masked)
    run_case(B=10, block_rows=8)
    # multi-step reduction per partial + ragged edge + clamped duplicate block
    run_case(B=37, block_rows=8)

    print("KERNEL_OK")
</pallas_src>

<mosaic_0001>
module attributes {stable_mosaic.version = 11 : i64} {
  func.func @_gen_loss_kernel(%arg0: i32, %arg1: i32, %arg2: memref<8x3072xf32, #tpu.memory_space<vmem>>, %arg3: memref<8x3072xf32, #tpu.memory_space<vmem>>, %arg4: memref<8x3072xf32, #tpu.memory_space<vmem>>, %arg5: memref<8x32xf32, #tpu.memory_space<vmem>>, %arg6: memref<8x32xf32, #tpu.memory_space<vmem>>, %arg7: memref<8x32xf32, #tpu.memory_space<vmem>>, %arg8: memref<1x8x1xf32, #tpu.memory_space<vmem>>) attributes {dimension_semantics = [#tpu.dimension_semantics<parallel>, #tpu.dimension_semantics<arbitrary>], iteration_bounds = array<i64: 1, 1>, scalar_prefetch = 0 : i64, scratch_operands = 0 : i64, tpu.core_type = #tpu.core_type<tc>, window_params = [{transform_indices = @transform_0, window_bounds = array<i64: 8, 3072>}, {transform_indices = @transform_1, window_bounds = array<i64: 8, 3072>}, {transform_indices = @transform_2, window_bounds = array<i64: 8, 3072>}, {transform_indices = @transform_3, window_bounds = array<i64: 8, 32>}, {transform_indices = @transform_4, window_bounds = array<i64: 8, 32>}, {transform_indices = @transform_5, window_bounds = array<i64: 8, 32>}, {transform_indices = @transform_6, window_bounds = array<i64: 1, 8, 1>}]} {
    %c0_i32 = arith.constant 0 : i32
    %0 = arith.cmpi eq, %arg1, %c0_i32 : i32
    %1 = arith.extui %0 : i1 to i32
    %c0_i32_0 = arith.constant 0 : i32
    %2 = arith.cmpi ne, %1, %c0_i32_0 : i32
    scf.if %2 {
      %cst_165 = arith.constant 0.000000e+00 : f32
      %401 = vector.broadcast %cst_165 : f32 to vector<1x8x1xf32>
      %c0_166 = arith.constant 0 : index
      %c0_167 = arith.constant 0 : index
      %c0_168 = arith.constant 0 : index
      %402 = vector.load %arg8[%c0_166, %c0_167, %c0_168] : memref<1x8x1xf32, #tpu.memory_space<vmem>>, vector<1x8x1xf32>
      tpu.vector_store %arg8[%c0_166, %c0_167, %c0_168], %401 {strides = array<i32>} : memref<1x8x1xf32, #tpu.memory_space<vmem>>, vector<1x8x1xf32>,
    } else {
    }
    %cst = arith.constant 0.000000e+00 : f32
    %3 = vector.broadcast %cst : f32 to vector<8x1xf32>
    %c0_i32_1 = arith.constant 0 : i32
    %c256_i32 = arith.constant 256 : i32
    %4 = arith.muli %c0_i32_1, %c256_i32 : i32
    %5 = tpu.assume_multiple %4, 256 : i32
    %c0 = arith.constant 0 : index
    %6 = arith.index_cast %5 : i32 to index
    %7 = vector.load %arg2[%c0, %6] : memref<8x3072xf32, #tpu.memory_space<vmem>>, vector<8x256xf32>
    %c0_2 = arith.constant 0 : index
    %8 = arith.index_cast %5 : i32 to index
    %9 = vector.load %arg3[%c0_2, %8] : memref<8x3072xf32, #tpu.memory_space<vmem>>, vector<8x256xf32>
    %10 = arith.subf %7, %9 : vector<8x256xf32>
    %11 = math.absf %10 : vector<8x256xf32>
    %cst_3 = arith.constant 9.99999997E-7 : f32
    %12 = vector.broadcast %cst_3 : f32 to vector<8x256xf32>
    %13 = arith.addf %11, %12 : vector<8x256xf32>
    %14 = arith.mulf %13, %13 : vector<8x256xf32>
    %cst_4 = arith.constant dense<0.000000e+00> : vector<8xf32>
    %15 = vector.multi_reduction <add>, %14, %cst_4 [1] : vector<8x256xf32> to vector<8xf32>
    %16 = vector.shape_cast %15 : vector<8xf32> to vector<8x1xf32>
    %17 = arith.addf %3, %16 : vector<8x1xf32>
    %c1_i32 = arith.constant 1 : i32
    %c256_i32_5 = arith.constant 256 : i32
    %18 = arith.muli %c1_i32, %c256_i32_5 : i32
    %19 = tpu.assume_multiple %18, 256 : i32
    %c0_6 = arith.constant 0 : index
    %20 = arith.index_cast %19 : i32 to index
    %21 = vector.load %arg2[%c0_6, %20] : memref<8x3072xf32, #tpu.memory_space<vmem>>, vector<8x256xf32>
    %c0_7 = arith.constant 0 : index
    %22 = arith.index_cast %19 : i32 to index
    %23 = vector.load %arg3[%c0_7, %22] : memref<8x3072xf32, #tpu.memory_space<vmem>>, vector<8x256xf32>
    %24 = arith.subf %21, %23 : vector<8x256xf32>
    %25 = math.absf %24 : vector<8x256xf32>
    %cst_8 = arith.constant 9.99999997E-7 : f32
    %26 = vector.broadcast %cst_8 : f32 to vector<8x256xf32>
    %27 = arith.addf %25, %26 : vector<8x256xf32>
    %28 = arith.mulf %27, %27 : vector<8x256xf32>
    %cst_9 = arith.constant dense<0.000000e+00> : vector<8xf32>
    %29 = vector.multi_reduction <add>, %28, %cst_9 [1] : vector<8x256xf32> to vector<8xf32>
    %30 = vector.shape_cast %29 : vector<8xf32> to vector<8x1xf32>
    %31 = arith.addf %17, %30 : vector<8x1xf32>
    %c2_i32 = arith.constant 2 : i32
    %c256_i32_10 = arith.constant 256 : i32
    %32 = arith.muli %c2_i32, %c256_i32_10 : i32
    %33 = tpu.assume_multiple %32, 256 : i32
    %c0_11 = arith.constant 0 : index
    %34 = arith.index_cast %33 : i32 to index
    %35 = vector.load %arg2[%c0_11, %34] : memref<8x3072xf32, #tpu.memory_space<vmem>>, vector<8x256xf32>
    %c0_12 = arith.constant 0 : index
    %36 = arith.index_cast %33 : i32 to index
    %37 = vector.load %arg3[%c0_12, %36] : memref<8x3072xf32, #tpu.memory_space<vmem>>, vector<8x256xf32>
    %38 = arith.subf %35, %37 : vector<8x256xf32>
    %39 = math.absf %38 : vector<8x256xf32>
    %cst_13 = arith.constant 9.99999997E-7 : f32
    %40 = vector.broadcast %cst_13 : f32 to vector<8x256xf32>
    %41 = arith.addf %39, %40 : vector<8x256xf32>
    %42 = arith.mulf %41, %41 : vector<8x256xf32>
    %cst_14 = arith.constant dense<0.000000e+00> : vector<8xf32>
    %43 = vector.multi_reduction <add>, %42, %cst_14 [1] : vector<8x256xf32> to vector<8xf32>
    %44 = vector.shape_cast %43 : vector<8xf32> to vector<8x1xf32>
    %45 = arith.addf %31, %44 : vector<8x1xf32>
    %c3_i32 = arith.constant 3 : i32
    %c256_i32_15 = arith.constant 256 : i32
    %46 = arith.muli %c3_i32, %c256_i32_15 : i32
    %47 = tpu.assume_multiple %46, 256 : i32
    %c0_16 = arith.constant 0 : index
    %48 = arith.index_cast %47 : i32 to index
    %49 = vector.load %arg2[%c0_16, %48] : memref<8x3072xf32, #tpu.memory_space<vmem>>, vector<8x256xf32>
    %c0_17 = arith.constant 0 : index
    %50 = arith.index_cast %47 : i32 to index
    %51 = vector.load %arg3[%c0_17, %50] : memref<8x3072xf32, #tpu.memory_space<vmem>>, vector<8x256xf32>
    %52 = arith.subf %49, %51 : vector<8x256xf32>
    %53 = math.absf %52 : vector<8x256xf32>
    %cst_18 = arith.constant 9.99999997E-7 : f32
    %54 = vector.broadcast %cst_18 : f32 to vector<8x256xf32>
    %55 = arith.addf %53, %54 : vector<8x256xf32>
    %56 = arith.mulf %55, %55 : vector<8x256xf32>
    %cst_19 = arith.constant dense<0.000000e+00> : vector<8xf32>
    %57 = vector.multi_reduction <add>, %56, %cst_19 [1] : vector<8x256xf32> to vector<8xf32>
    %58 = vector.shape_cast %57 : vector<8xf32> to vector<8x1xf32>
    %59 = arith.addf %45, %58 : vector<8x1xf32>
    %c4_i32 = arith.constant 4 : i32
    %c256_i32_20 = arith.constant 256 : i32
    %60 = arith.muli %c4_i32, %c256_i32_20 : i32
    %61 = tpu.assume_multiple %60, 256 : i32
    %c0_21 = arith.constant 0 : index
    %62 = arith.index_cast %61 : i32 to index
    %63 = vector.load %arg2[%c0_21, %62] : memref<8x3072xf32, #tpu.memory_space<vmem>>, vector<8x256xf32>
    %c0_22 = arith.constant 0 : index
    %64 = arith.index_cast %61 : i32 to index
    %65 = vector.load %arg3[%c0_22, %64] : memref<8x3072xf32, #tpu.memory_space<vmem>>, vector<8x256xf32>
    %66 = arith.subf %63, %65 : vector<8x256xf32>
    %67 = math.absf %66 : vector<8x256xf32>
    %cst_23 = arith.constant 9.99999997E-7 : f32
    %68 = vector.broadcast %cst_23 : f32 to vector<8x256xf32>
    %69 = arith.addf %67, %68 : vector<8x256xf32>
    %70 = arith.mulf %69, %69 : vector<8x256xf32>
    %cst_24 = arith.constant dense<0.000000e+00> : vector<8xf32>
    %71 = vector.multi_reduction <add>, %70, %cst_24 [1] : vector<8x256xf32> to vector<8xf32>
    %72 = vector.shape_cast %71 : vector<8xf32> to vector<8x1xf32>
    %73 = arith.addf %59, %72 : vector<8x1xf32>
    %c5_i32 = arith.constant 5 : i32
    %c256_i32_25 = arith.constant 256 : i32
    %74 = arith.muli %c5_i32, %c256_i32_25 : i32
    %75 = tpu.assume_multiple %74, 256 : i32
    %c0_26 = arith.constant 0 : index
    %76 = arith.index_cast %75 : i32 to index
    %77 = vector.load %arg2[%c0_26, %76] : memref<8x3072xf32, #tpu.memory_space<vmem>>, vector<8x256xf32>
    %c0_27 = arith.constant 0 : index
    %78 = arith.index_cast %75 : i32 to index
    %79 = vector.load %arg3[%c0_27, %78] : memref<8x3072xf32, #tpu.memory_space<vmem>>, vector<8x256xf32>
    %80 = arith.subf %77, %79 : vector<8x256xf32>
    %81 = math.absf %80 : vector<8x256xf32>
    %cst_28 = arith.constant 9.99999997E-7 : f32
    %82 = vector.broadcast %cst_28 : f32 to vector<8x256xf32>
    %83 = arith.addf %81, %82 : vector<8x256xf32>
    %84 = arith.mulf %83, %83 : vector<8x256xf32>
    %cst_29 = arith.constant dense<0.000000e+00> : vector<8xf32>
    %85 = vector.multi_reduction <add>, %84, %cst_29 [1] : vector<8x256xf32> to vector<8xf32>
    %86 = vector.shape_cast %85 : vector<8xf32> to vector<8x1xf32>
    %87 = arith.addf %73, %86 : vector<8x1xf32>
    %c6_i32 = arith.constant 6 : i32
    %c256_i32_30 = arith.constant 256 : i32
    %88 = arith.muli %c6_i32, %c256_i32_30 : i32
    %89 = tpu.assume_multiple %88, 256 : i32
    %c0_31 = arith.constant 0 : index
    %90 = arith.index_cast %89 : i32 to index
    %91 = vector.load %arg2[%c0_31, %90] : memref<8x3072xf32, #tpu.memory_space<vmem>>, vector<8x256xf32>
    %c0_32 = arith.constant 0 : index
    %92 = arith.index_cast %89 : i32 to index
    %93 = vector.load %arg3[%c0_32, %92] : memref<8x3072xf32, #tpu.memory_space<vmem>>, vector<8x256xf32>
    %94 = arith.subf %91, %93 : vector<8x256xf32>
    %95 = math.absf %94 : vector<8x256xf32>
    %cst_33 = arith.constant 9.99999997E-7 : f32
    %96 = vector.broadcast %cst_33 : f32 to vector<8x256xf32>
    %97 = arith.addf %95, %96 : vector<8x256xf32>
    %98 = arith.mulf %97, %97 : vector<8x256xf32>
    %cst_34 = arith.constant dense<0.000000e+00> : vector<8xf32>
    %99 = vector.multi_reduction <add>, %98, %cst_34 [1] : vector<8x256xf32> to vector<8xf32>
    %100 = vector.shape_cast %99 : vector<8xf32> to vector<8x1xf32>
    %101 = arith.addf %87, %100 : vector<8x1xf32>
    %c7_i32 = arith.constant 7 : i32
    %c256_i32_35 = arith.constant 256 : i32
    %102 = arith.muli %c7_i32, %c256_i32_35 : i32
    %103 = tpu.assume_multiple %102, 256 : i32
    %c0_36 = arith.constant 0 : index
    %104 = arith.index_cast %103 : i32 to index
    %105 = vector.load %arg2[%c0_36, %104] : memref<8x3072xf32, #tpu.memory_space<vmem>>, vector<8x256xf32>
    %c0_37 = arith.constant 0 : index
    %106 = arith.index_cast %103 : i32 to index
    %107 = vector.load %arg3[%c0_37, %106] : memref<8x3072xf32, #tpu.memory_space<vmem>>, vector<8x256xf32>
    %108 = arith.subf %105, %107 : vector<8x256xf32>
    %109 = math.absf %108 : vector<8x256xf32>
    %cst_38 = arith.constant 9.99999997E-7 : f32
    %110 = vector.broadcast %cst_38 : f32 to vector<8x256xf32>
    %111 = arith.addf %109, %110 : vector<8x256xf32>
    %112 = arith.mulf %111, %111 : vector<8x256xf32>
    %cst_39 = arith.constant dense<0.000000e+00> : vector<8xf32>
    %113 = vector.multi_reduction <add>, %112, %cst_39 [1] : vector<8x256xf32> to vector<8xf32>
    %114 = vector.shape_cast %113 : vector<8xf32> to vector<8x1xf32>
    %115 = arith.addf %101, %114 : vector<8x1xf32>
    %c8_i32 = arith.constant 8 : i32
    %c256_i32_40 = arith.constant 256 : i32
    %116 = arith.muli %c8_i32, %c256_i32_40 : i32
    %117 = tpu.assume_multiple %116, 256 : i32
    %c0_41 = arith.constant 0 : index
    %118 = arith.index_cast %117 : i32 to index
    %119 = vector.load %arg2[%c0_41, %118] : memref<8x3072xf32, #tpu.memory_space<vmem>>, vector<8x256xf32>
    %c0_42 = arith.constant 0 : index
    %120 = arith.index_cast %117 : i32 to index
    %121 = vector.load %arg3[%c0_42, %120] : memref<8x3072xf32, #tpu.memory_space<vmem>>, vector<8x256xf32>
    %122 = arith.subf %119, %121 : vector<8x256xf32>
    %123 = math.absf %122 : vector<8x256xf32>
    %cst_43 = arith.constant 9.99999997E-7 : f32
    %124 = vector.broadcast %cst_43 : f32 to vector<8x256xf32>
    %125 = arith.addf %123, %124 : vector<8x256xf32>
    %126 = arith.mulf %125, %125 : vector<8x256xf32>
    %cst_44 = arith.constant dense<0.000000e+00> : vector<8xf32>
    %127 = vector.multi_reduction <add>, %126, %cst_44 [1] : vector<8x256xf32> to vector<8xf32>
    %128 = vector.shape_cast %127 : vector<8xf32> to vector<8x1xf32>
    %129 = arith.addf %115, %128 : vector<8x1xf32>
    %c9_i32 = arith.constant 9 : i32
    %c256_i32_45 = arith.constant 256 : i32
    %130 = arith.muli %c9_i32, %c256_i32_45 : i32
    %131 = tpu.assume_multiple %130, 256 : i32
    %c0_46 = arith.constant 0 : index
    %132 = arith.index_cast %131 : i32 to index
    %133 = vector.load %arg2[%c0_46, %132] : memref<8x3072xf32, #tpu.memory_space<vmem>>, vector<8x256xf32>
    %c0_47 = arith.constant 0 : index
    %134 = arith.index_cast %131 : i32 to index
    %135 = vector.load %arg3[%c0_47, %134] : memref<8x3072xf32, #tpu.memory_space<vmem>>, vector<8x256xf32>
    %136 = arith.subf %133, %135 : vector<8x256xf32>
    %137 = math.absf %136 : vector<8x256xf32>
    %cst_48 = arith.constant 9.99999997E-7 : f32
    %138 = vector.broadcast %cst_48 : f32 to vector<8x256xf32>
    %139 = arith.addf %137, %138 : vector<8x256xf32>
    %140 = arith.mulf %139, %139 : vector<8x256xf32>
    %cst_49 = arith.constant dense<0.000000e+00> : vector<8xf32>
    %141 = vector.multi_reduction <add>, %140, %cst_49 [1] : vector<8x256xf32> to vector<8xf32>
    %142 = vector.shape_cast %141 : vector<8xf32> to vector<8x1xf32>
    %143 = arith.addf %129, %142 : vector<8x1xf32>
    %c10_i32 = arith.constant 10 : i32
    %c256_i32_50 = arith.constant 256 : i32
    %144 = arith.muli %c10_i32, %c256_i32_50 : i32
    %145 = tpu.assume_multiple %144, 256 : i32
    %c0_51 = arith.constant 0 : index
    %146 = arith.index_cast %145 : i32 to index
    %147 = vector.load %arg2[%c0_51, %146] : memref<8x3072xf32, #tpu.memory_space<vmem>>, vector<8x256xf32>
    %c0_52 = arith.constant 0 : index
    %148 = arith.index_cast %145 : i32 to index
    %149 = vector.load %arg3[%c0_52, %148] : memref<8x3072xf32, #tpu.memory_space<vmem>>, vector<8x256xf32>
    %150 = arith.subf %147, %149 : vector<8x256xf32>
    %151 = math.absf %150 : vector<8x256xf32>
    %cst_53 = arith.constant 9.99999997E-7 : f32
    %152 = vector.broadcast %cst_53 : f32 to vector<8x256xf32>
    %153 = arith.addf %151, %152 : vector<8x256xf32>
    %154 = arith.mulf %153, %153 : vector<8x256xf32>
    %cst_54 = arith.constant dense<0.000000e+00> : vector<8xf32>
    %155 = vector.multi_reduction <add>, %154, %cst_54 [1] : vector<8x256xf32> to vector<8xf32>
    %156 = vector.shape_cast %155 : vector<8xf32> to vector<8x1xf32>
    %157 = arith.addf %143, %156 : vector<8x1xf32>
    %c11_i32 = arith.constant 11 : i32
    %c256_i32_55 = arith.constant 256 : i32
    %158 = arith.muli %c11_i32, %c256_i32_55 : i32
    %159 = tpu.assume_multiple %158, 256 : i32
    %c0_56 = arith.constant 0 : index
    %160 = arith.index_cast %159 : i32 to index
    %161 = vector.load %arg2[%c0_56, %160] : memref<8x3072xf32, #tpu.memory_space<vmem>>, vector<8x256xf32>
    %c0_57 = arith.constant 0 : index
    %162 = arith.index_cast %159 : i32 to index
    %163 = vector.load %arg3[%c0_57, %162] : memref<8x3072xf32, #tpu.memory_space<vmem>>, vector<8x256xf32>
    %164 = arith.subf %161, %163 : vector<8x256xf32>
    %165 = math.absf %164 : vector<8x256xf32>
    %cst_58 = arith.constant 9.99999997E-7 : f32
    %166 = vector.broadcast %cst_58 : f32 to vector<8x256xf32>
    %167 = arith.addf %165, %166 : vector<8x256xf32>
    %168 = arith.mulf %167, %167 : vector<8x256xf32>
    %cst_59 = arith.constant dense<0.000000e+00> : vector<8xf32>
    %169 = vector.multi_reduction <add>, %168, %cst_59 [1] : vector<8x256xf32> to vector<8xf32>
    %170 = vector.shape_cast %169 : vector<8xf32> to vector<8x1xf32>
    %171 = arith.addf %157, %170 : vector<8x1xf32>
    %c12_i32 = arith.constant 12 : i32
    %cst_60 = arith.constant 0.000000e+00 : f32
    %172 = vector.broadcast %cst_60 : f32 to vector<8x1xf32>
    %c0_i32_61 = arith.constant 0 : i32
    %c256_i32_62 = arith.constant 256 : i32
    %173 = arith.muli %c0_i32_61, %c256_i32_62 : i32
    %174 = tpu.assume_multiple %173, 256 : i32
    %c0_63 = arith.constant 0 : index
    %175 = arith.index_cast %174 : i32 to index
    %176 = vector.load %arg3[%c0_63, %175] : memref<8x3072xf32, #tpu.memory_space<vmem>>, vector<8x256xf32>
    %c0_64 = arith.constant 0 : index
    %177 = arith.index_cast %174 : i32 to index
    %178 = vector.load %arg4[%c0_64, %177] : memref<8x3072xf32, #tpu.memory_space<vmem>>, vector<8x256xf32>
    %179 = arith.subf %176, %178 : vector<8x256xf32>
    %180 = math.absf %179 : vector<8x256xf32>
    %cst_65 = arith.constant 9.99999997E-7 : f32
    %181 = vector.broadcast %cst_65 : f32 to vector<8x256xf32>
    %182 = arith.addf %180, %181 : vector<8x256xf32>
    %183 = arith.mulf %182, %182 : vector<8x256xf32>
    %cst_66 = arith.constant dense<0.000000e+00> : vector<8xf32>
    %184 = vector.multi_reduction <add>, %183, %cst_66 [1] : vector<8x256xf32> to vector<8xf32>
    %185 = vector.shape_cast %184 : vector<8xf32> to vector<8x1xf32>
    %186 = arith.addf %172, %185 : vector<8x1xf32>
    %c1_i32_67 = arith.constant 1 : i32
    %c256_i32_68 = arith.constant 256 : i32
    %187 = arith.muli %c1_i32_67, %c256_i32_68 : i32
    %188 = tpu.assume_multiple %187, 256 : i32
    %c0_69 = arith.constant 0 : index
    %189 = arith.index_cast %188 : i32 to index
    %190 = vector.load %arg3[%c0_69, %189] : memref<8x3072xf32, #tpu.memory_space<vmem>>, vector<8x256xf32>
    %c0_70 = arith.constant 0 : index
    %191 = arith.index_cast %188 : i32 to index
    %192 = vector.load %arg4[%c0_70, %191] : memref<8x3072xf32, #tpu.memory_space<vmem>>, vector<8x256xf32>
    %193 = arith.subf %190, %192 : vector<8x256xf32>
    %194 = math.absf %193 : vector<8x256xf32>
    %cst_71 = arith.constant 9.99999997E-7 : f32
    %195 = vector.broadcast %cst_71 : f32 to vector<8x256xf32>
    %196 = arith.addf %194, %195 : vector<8x256xf32>
    %197 = arith.mulf %196, %196 : vector<8x256xf32>
    %cst_72 = arith.constant dense<0.000000e+00> : vector<8xf32>
    %198 = vector.multi_reduction <add>, %197, %cst_72 [1] : vector<8x256xf32> to vector<8xf32>
    %199 = vector.shape_cast %198 : vector<8xf32> to vector<8x1xf32>
    %200 = arith.addf %186, %199 : vector<8x1xf32>
    %c2_i32_73 = arith.constant 2 : i32
    %c256_i32_74 = arith.constant 256 : i32
    %201 = arith.muli %c2_i32_73, %c256_i32_74 : i32
    %202 = tpu.assume_multiple %201, 256 : i32
    %c0_75 = arith.constant 0 : index
    %203 = arith.index_cast %202 : i32 to index
    %204 = vector.load %arg3[%c0_75, %203] : memref<8x3072xf32, #tpu.memory_space<vmem>>, vector<8x256xf32>
    %c0_76 = arith.constant 0 : index
    %205 = arith.index_cast %202 : i32 to index
    %206 = vector.load %arg4[%c0_76, %205] : memref<8x3072xf32, #tpu.memory_space<vmem>>, vector<8x256xf32>
    %207 = arith.subf %204, %206 : vector<8x256xf32>
    %208 = math.absf %207 : vector<8x256xf32>
    %cst_77 = arith.constant 9.99999997E-7 : f32
    %209 = vector.broadcast %cst_77 : f32 to vector<8x256xf32>
    %210 = arith.addf %208, %209 : vector<8x256xf32>
    %211 = arith.mulf %210, %210 : vector<8x256xf32>
    %cst_78 = arith.constant dense<0.000000e+00> : vector<8xf32>
    %212 = vector.multi_reduction <add>, %211, %cst_78 [1] : vector<8x256xf32> to vector<8xf32>
    %213 = vector.shape_cast %212 : vector<8xf32> to vector<8x1xf32>
    %214 = arith.addf %200, %213 : vector<8x1xf32>
    %c3_i32_79 = arith.constant 3 : i32
    %c256_i32_80 = arith.constant 256 : i32
    %215 = arith.muli %c3_i32_79, %c256_i32_80 : i32
    %216 = tpu.assume_multiple %215, 256 : i32
    %c0_81 = arith.constant 0 : index
    %217 = arith.index_cast %216 : i32 to index
    %218 = vector.load %arg3[%c0_81, %217] : memref<8x3072xf32, #tpu.memory_space<vmem>>, vector<8x256xf32>
    %c0_82 = arith.constant 0 : index
    %219 = arith.index_cast %216 : i32 to index
    %220 = vector.load %arg4[%c0_82, %219] : memref<8x3072xf32, #tpu.memory_space<vmem>>, vector<8x256xf32>
    %221 = arith.subf %218, %220 : vector<8x256xf32>
    %222 = math.absf %221 : vector<8x256xf32>
    %cst_83 = arith.constant 9.99999997E-7 : f32
    %223 = vector.broadcast %cst_83 : f32 to vector<8x256xf32>
    %224 = arith.addf %222, %223 : vector<8x256xf32>
    %225 = arith.mulf %224, %224 : vector<8x256xf32>
    %cst_84 = arith.constant dense<0.000000e+00> : vector<8xf32>
    %226 = vector.multi_reduction <add>, %225, %cst_84 [1] : vector<8x256xf32> to vector<8xf32>
    %227 = vector.shape_cast %226 : vector<8xf32> to vector<8x1xf32>
    %228 = arith.addf %214, %227 : vector<8x1xf32>
    %c4_i32_85 = arith.constant 4 : i32
    %c256_i32_86 = arith.constant 256 : i32
    %229 = arith.muli %c4_i32_85, %c256_i32_86 : i32
    %230 = tpu.assume_multiple %229, 256 : i32
    %c0_87 = arith.constant 0 : index
    %231 = arith.index_cast %230 : i32 to index
    %232 = vector.load %arg3[%c0_87, %231] : memref<8x3072xf32, #tpu.memory_space<vmem>>, vector<8x256xf32>
    %c0_88 = arith.constant 0 : index
    %233 = arith.index_cast %230 : i32 to index
    %234 = vector.load %arg4[%c0_88, %233] : memref<8x3072xf32, #tpu.memory_space<vmem>>, vector<8x256xf32>
    %235 = arith.subf %232, %234 : vector<8x256xf32>
    %236 = math.absf %235 : vector<8x256xf32>
    %cst_89 = arith.constant 9.99999997E-7 : f32
    %237 = vector.broadcast %cst_89 : f32 to vector<8x256xf32>
    %238 = arith.addf %236, %237 : vector<8x256xf32>
    %239 = arith.mulf %238, %238 : vector<8x256xf32>
    %cst_90 = arith.constant dense<0.000000e+00> : vector<8xf32>
    %240 = vector.multi_reduction <add>, %239, %cst_90 [1] : vector<8x256xf32> to vector<8xf32>
    %241 = vector.shape_cast %240 : vector<8xf32> to vector<8x1xf32>
    %242 = arith.addf %228, %241 : vector<8x1xf32>
    %c5_i32_91 = arith.constant 5 : i32
    %c256_i32_92 = arith.constant 256 : i32
    %243 = arith.muli %c5_i32_91, %c256_i32_92 : i32
    %244 = tpu.assume_multiple %243, 256 : i32
    %c0_93 = arith.constant 0 : index
    %245 = arith.index_cast %244 : i32 to index
    %246 = vector.load %arg3[%c0_93, %245] : memref<8x3072xf32, #tpu.memory_space<vmem>>, vector<8x256xf32>
    %c0_94 = arith.constant 0 : index
    %247 = arith.index_cast %244 : i32 to index
    %248 = vector.load %arg4[%c0_94, %247] : memref<8x3072xf32, #tpu.memory_space<vmem>>, vector<8x256xf32>
    %249 = arith.subf %246, %248 : vector<8x256xf32>
    %250 = math.absf %249 : vector<8x256xf32>
    %cst_95 = arith.constant 9.99999997E-7 : f32
    %251 = vector.broadcast %cst_95 : f32 to vector<8x256xf32>
    %252 = arith.addf %250, %251 : vector<8x256xf32>
    %253 = arith.mulf %252, %252 : vector<8x256xf32>
    %cst_96 = arith.constant dense<0.000000e+00> : vector<8xf32>
    %254 = vector.multi_reduction <add>, %253, %cst_96 [1] : vector<8x256xf32> to vector<8xf32>
    %255 = vector.shape_cast %254 : vector<8xf32> to vector<8x1xf32>
    %256 = arith.addf %242, %255 : vector<8x1xf32>
    %c6_i32_97 = arith.constant 6 : i32
    %c256_i32_98 = arith.constant 256 : i32
    %257 = arith.muli %c6_i32_97, %c256_i32_98 : i32
    %258 = tpu.assume_multiple %257, 256 : i32
    %c0_99 = arith.constant 0 : index
    %259 = arith.index_cast %258 : i32 to index
    %260 = vector.load %arg3[%c0_99, %259] : memref<8x3072xf32, #tpu.memory_space<vmem>>, vector<8x256xf32>
    %c0_100 = arith.constant 0 : index
    %261 = arith.index_cast %258 : i32 to index
    %262 = vector.load %arg4[%c0_100, %261] : memref<8x3072xf32, #tpu.memory_space<vmem>>, vector<8x256xf32>
    %263 = arith.subf %260, %262 : vector<8x256xf32>
    %264 = math.absf %263 : vector<8x256xf32>
    %cst_101 = arith.constant 9.99999997E-7 : f32
    %265 = vector.broadcast %cst_101 : f32 to vector<8x256xf32>
    %266 = arith.addf %264, %265 : vector<8x256xf32>
    %267 = arith.mulf %266, %266 : vector<8x256xf32>
    %cst_102 = arith.constant dense<0.000000e+00> : vector<8xf32>
    %268 = vector.multi_reduction <add>, %267, %cst_102 [1] : vector<8x256xf32> to vector<8xf32>
    %269 = vector.shape_cast %268 : vector<8xf32> to vector<8x1xf32>
    %270 = arith.addf %256, %269 : vector<8x1xf32>
    %c7_i32_103 = arith.constant 7 : i32
    %c256_i32_104 = arith.constant 256 : i32
    %271 = arith.muli %c7_i32_103, %c256_i32_104 : i32
    %272 = tpu.assume_multiple %271, 256 : i32
    %c0_105 = arith.constant 0 : index
    %273 = arith.index_cast %272 : i32 to index
    %274 = vector.load %arg3[%c0_105, %273] : memref<8x3072xf32, #tpu.memory_space<vmem>>, vector<8x256xf32>
    %c0_106 = arith.constant 0 : index
    %275 = arith.index_cast %272 : i32 to index
    %276 = vector.load %arg4[%c0_106, %275] : memref<8x3072xf32, #tpu.memory_space<vmem>>, vector<8x256xf32>
    %277 = arith.subf %274, %276 : vector<8x256xf32>
    %278 = math.absf %277 : vector<8x256xf32>
    %cst_107 = arith.constant 9.99999997E-7 : f32
    %279 = vector.broadcast %cst_107 : f32 to vector<8x256xf32>
    %280 = arith.addf %278, %279 : vector<8x256xf32>
    %281 = arith.mulf %280, %280 : vector<8x256xf32>
    %cst_108 = arith.constant dense<0.000000e+00> : vector<8xf32>
    %282 = vector.multi_reduction <add>, %281, %cst_108 [1] : vector<8x256xf32> to vector<8xf32>
    %283 = vector.shape_cast %282 : vector<8xf32> to vector<8x1xf32>
    %284 = arith.addf %270, %283 : vector<8x1xf32>
    %c8_i32_109 = arith.constant 8 : i32
    %c256_i32_110 = arith.constant 256 : i32
    %285 = arith.muli %c8_i32_109, %c256_i32_110 : i32
    %286 = tpu.assume_multiple %285, 256 : i32
    %c0_111 = arith.constant 0 : index
    %287 = arith.index_cast %286 : i32 to index
    %288 = vector.load %arg3[%c0_111, %287] : memref<8x3072xf32, #tpu.memory_space<vmem>>, vector<8x256xf32>
    %c0_112 = arith.constant 0 : index
    %289 = arith.index_cast %286 : i32 to index
    %290 = vector.load %arg4[%c0_112, %289] : memref<8x3072xf32, #tpu.memory_space<vmem>>, vector<8x256xf32>
    %291 = arith.subf %288, %290 : vector<8x256xf32>
    %292 = math.absf %291 : vector<8x256xf32>
    %cst_113 = arith.constant 9.99999997E-7 : f32
    %293 = vector.broadcast %cst_113 : f32 to vector<8x256xf32>
    %294 = arith.addf %292, %293 : vector<8x256xf32>
    %295 = arith.mulf %294, %294 : vector<8x256xf32>
    %cst_114 = arith.constant dense<0.000000e+00> : vector<8xf32>
    %296 = vector.multi_reduction <add>, %295, %cst_114 [1] : vector<8x256xf32> to vector<8xf32>
    %297 = vector.shape_cast %296 : vector<8xf32> to vector<8x1xf32>
    %298 = arith.addf %284, %297 : vector<8x1xf32>
    %c9_i32_115 = arith.constant 9 : i32
    %c256_i32_116 = arith.constant 256 : i32
    %299 = arith.muli %c9_i32_115, %c256_i32_116 : i32
    %300 = tpu.assume_multiple %299, 256 : i32
    %c0_117 = arith.constant 0 : index
    %301 = arith.index_cast %300 : i32 to index
    %302 = vector.load %arg3[%c0_117, %301] : memref<8x3072xf32, #tpu.memory_space<vmem>>, vector<8x256xf32>
    %c0_118 = arith.constant 0 : index
    %303 = arith.index_cast %300 : i32 to index
    %304 = vector.load %arg4[%c0_118, %303] : memref<8x3072xf32, #tpu.memory_space<vmem>>, vector<8x256xf32>
    %305 = arith.subf %302, %304 : vector<8x256xf32>
    %306 = math.absf %305 : vector<8x256xf32>
    %cst_119 = arith.constant 9.99999997E-7 : f32
    %307 = vector.broadcast %cst_119 : f32 to vector<8x256xf32>
    %308 = arith.addf %306, %307 : vector<8x256xf32>
    %309 = arith.mulf %308, %308 : vector<8x256xf32>
    %cst_120 = arith.constant dense<0.000000e+00> : vector<8xf32>
    %310 = vector.multi_reduction <add>, %309, %cst_120 [1] : vector<8x256xf32> to vector<8xf32>
    %311 = vector.shape_cast %310 : vector<8xf32> to vector<8x1xf32>
    %312 = arith.addf %298, %311 : vector<8x1xf32>
    %c10_i32_121 = arith.constant 10 : i32
    %c256_i32_122 = arith.constant 256 : i32
    %313 = arith.muli %c10_i32_121, %c256_i32_122 : i32
    %314 = tpu.assume_multiple %313, 256 : i32
    %c0_123 = arith.constant 0 : index
    %315 = arith.index_cast %314 : i32 to index
    %316 = vector.load %arg3[%c0_123, %315] : memref<8x3072xf32, #tpu.memory_space<vmem>>, vector<8x256xf32>
    %c0_124 = arith.constant 0 : index
    %317 = arith.index_cast %314 : i32 to index
    %318 = vector.load %arg4[%c0_124, %317] : memref<8x3072xf32, #tpu.memory_space<vmem>>, vector<8x256xf32>
    %319 = arith.subf %316, %318 : vector<8x256xf32>
    %320 = math.absf %319 : vector<8x256xf32>
    %cst_125 = arith.constant 9.99999997E-7 : f32
    %321 = vector.broadcast %cst_125 : f32 to vector<8x256xf32>
    %322 = arith.addf %320, %321 : vector<8x256xf32>
    %323 = arith.mulf %322, %322 : vector<8x256xf32>
    %cst_126 = arith.constant dense<0.000000e+00> : vector<8xf32>
    %324 = vector.multi_reduction <add>, %323, %cst_126 [1] : vector<8x256xf32> to vector<8xf32>
    %325 = vector.shape_cast %324 : vector<8xf32> to vector<8x1xf32>
    %326 = arith.addf %312, %325 : vector<8x1xf32>
    %c11_i32_127 = arith.constant 11 : i32
    %c256_i32_128 = arith.constant 256 : i32
    %327 = arith.muli %c11_i32_127, %c256_i32_128 : i32
    %328 = tpu.assume_multiple %327, 256 : i32
    %c0_129 = arith.constant 0 : index
    %329 = arith.index_cast %328 : i32 to index
    %330 = vector.load %arg3[%c0_129, %329] : memref<8x3072xf32, #tpu.memory_space<vmem>>, vector<8x256xf32>
    %c0_130 = arith.constant 0 : index
    %331 = arith.index_cast %328 : i32 to index
    %332 = vector.load %arg4[%c0_130, %331] : memref<8x3072xf32, #tpu.memory_space<vmem>>, vector<8x256xf32>
    %333 = arith.subf %330, %332 : vector<8x256xf32>
    %334 = math.absf %333 : vector<8x256xf32>
    %cst_131 = arith.constant 9.99999997E-7 : f32
    %335 = vector.broadcast %cst_131 : f32 to vector<8x256xf32>
    %336 = arith.addf %334, %335 : vector<8x256xf32>
    %337 = arith.mulf %336, %336 : vector<8x256xf32>
    %cst_132 = arith.constant dense<0.000000e+00> : vector<8xf32>
    %338 = vector.multi_reduction <add>, %337, %cst_132 [1] : vector<8x256xf32> to vector<8xf32>
    %339 = vector.shape_cast %338 : vector<8xf32> to vector<8x1xf32>
    %340 = arith.addf %326, %339 : vector<8x1xf32>
    %c12_i32_133 = arith.constant 12 : i32
    %cst_134 = arith.constant 0.00999999977 : f32
    %341 = vector.broadcast %cst_134 : f32 to vector<8x1xf32>
    %342 = arith.mulf %341, %340 : vector<8x1xf32>
    %c0_135 = arith.constant 0 : index
    %c0_136 = arith.constant 0 : index
    %343 = vector.load %arg5[%c0_135, %c0_136] : memref<8x32xf32, #tpu.memory_space<vmem>>, vector<8x32xf32>
    %c0_137 = arith.constant 0 : index
    %c0_138 = arith.constant 0 : index
    %344 = vector.load %arg6[%c0_137, %c0_138] : memref<8x32xf32, #tpu.memory_space<vmem>>, vector<8x32xf32>
    %c0_139 = arith.constant 0 : index
    %c0_140 = arith.constant 0 : index
    %345 = vector.load %arg7[%c0_139, %c0_140] : memref<8x32xf32, #tpu.memory_space<vmem>>, vector<8x32xf32>
    %346 = arith.subf %343, %345 : vector<8x32xf32>
    %347 = math.absf %346 : vector<8x32xf32>
    %cst_141 = arith.constant 9.99999997E-7 : f32
    %348 = vector.broadcast %cst_141 : f32 to vector<8x32xf32>
    %349 = arith.addf %347, %348 : vector<8x32xf32>
    %350 = arith.subf %344, %345 : vector<8x32xf32>
    %351 = math.absf %350 : vector<8x32xf32>
    %cst_142 = arith.constant 9.99999997E-7 : f32
    %352 = vector.broadcast %cst_142 : f32 to vector<8x32xf32>
    %353 = arith.addf %351, %352 : vector<8x32xf32>
    %354 = arith.mulf %349, %349 : vector<8x32xf32>
    %cst_143 = arith.constant dense<0.000000e+00> : vector<8xf32>
    %355 = vector.multi_reduction <add>, %354, %cst_143 [1] : vector<8x32xf32> to vector<8xf32>
    %356 = vector.shape_cast %355 : vector<8xf32> to vector<8x1xf32>
    %357 = arith.mulf %353, %353 : vector<8x32xf32>
    %cst_144 = arith.constant dense<0.000000e+00> : vector<8xf32>
    %358 = vector.multi_reduction <add>, %357, %cst_144 [1] : vector<8x32xf32> to vector<8xf32>
    %359 = vector.shape_cast %358 : vector<8xf32> to vector<8x1xf32>
    %cst_145 = arith.constant 5.000000e-01 : f32
    %360 = vector.broadcast %cst_145 : f32 to vector<8x1xf32>
    %361 = arith.addf %171, %360 : vector<8x1xf32>
    %362 = math.log %361 : vector<8x1xf32>
    %cst_146 = arith.constant 5.000000e-01 : f32
    %363 = vector.broadcast %cst_146 : f32 to vector<8x1xf32>
    %364 = arith.addf %342, %363 : vector<8x1xf32>
    %365 = math.log %364 : vector<8x1xf32>
    %cst_147 = arith.constant 1.000000e+00 : f32
    %366 = vector.broadcast %cst_147 : f32 to vector<8x1xf32>
    %367 = arith.addf %365, %366 : vector<8x1xf32>
    %cst_148 = arith.constant 5.000000e-01 : f32
    %368 = vector.broadcast %cst_148 : f32 to vector<8x1xf32>
    %369 = arith.addf %356, %368 : vector<8x1xf32>
    %370 = math.log %369 : vector<8x1xf32>
    %cst_149 = arith.constant 5.000000e-01 : f32
    %371 = vector.broadcast %cst_149 : f32 to vector<8x1xf32>
    %372 = arith.addf %359, %371 : vector<8x1xf32>
    %373 = math.log %372 : vector<8x1xf32>
    %cst_150 = arith.constant 1.000000e+00 : f32
    %374 = vector.broadcast %cst_150 : f32 to vector<8x1xf32>
    %375 = arith.addf %373, %374 : vector<8x1xf32>
    %cst_151 = arith.constant 5.000000e-01 : f32
    %376 = vector.broadcast %cst_151 : f32 to vector<8x1xf32>
    %377 = arith.subf %375, %376 : vector<8x1xf32>
    %378 = arith.subf %377, %370 : vector<8x1xf32>
    %cst_152 = arith.constant 0.000000e+00 : f32
    %379 = vector.broadcast %cst_152 : f32 to vector<8x1xf32>
    %380 = arith.maximumf %378, %379 : vector<8x1xf32>
    %cst_153 = arith.constant 1.000000e+00 : f32
    %381 = vector.broadcast %cst_153 : f32 to vector<8x1xf32>
    %382 = arith.mulf %381, %367 : vector<8x1xf32>
    %383 = arith.addf %362, %382 : vector<8x1xf32>
    %cst_154 = arith.constant 1.000000e+00 : f32
    %384 = vector.broadcast %cst_154 : f32 to vector<8x1xf32>
    %385 = arith.mulf %384, %380 : vector<8x1xf32>
    %386 = arith.addf %383, %385 : vector<8x1xf32>
    %c1_i32_155 = arith.constant 1 : i32
    %387 = arith.muli %arg0, %c1_i32_155 : i32
    %388 = arith.addi %387, %arg1 : i32
    %c8_i32_156 = arith.constant 8 : i32
    %389 = arith.muli %388, %c8_i32_156 : i32
    %390 = tpu.iota {dimensions = array<i32: 0>} : vector<8x1xi32>
    %391 = vector.broadcast %389 : i32 to vector<8x1xi32>
    %392 = arith.addi %391, %390 : vector<8x1xi32>
    %c2_i32_157 = arith.constant 2 : i32
    %393 = vector.broadcast %c2_i32_157 : i32 to vector<8x1xi32>
    %394 = arith.cmpi slt, %392, %393 : vector<8x1xi32>
    %cst_158 = arith.constant 0.000000e+00 : f32
    %395 = vector.broadcast %cst_158 : f32 to vector<8x1xf32>
    %396 = arith.select %394, %386, %395 : vector<8x1xi1>, vector<8x1xf32>
    %c0_159 = arith.constant 0 : index
    %c0_160 = arith.constant 0 : index
    %c0_161 = arith.constant 0 : index
    %397 = vector.load %arg8[%c0_159, %c0_160, %c0_161] : memref<1x8x1xf32, #tpu.memory_space<vmem>>, vector<1x8x1xf32>
    %398 = vector.shape_cast %396 : vector<8x1xf32> to vector<1x8x1xf32>
    %399 = arith.addf %397, %398 : vector<1x8x1xf32>
    %c0_162 = arith.constant 0 : index
    %c0_163 = arith.constant 0 : index
    %c0_164 = arith.constant 0 : index
    %400 = vector.load %arg8[%c0_162, %c0_163, %c0_164] : memref<1x8x1xf32, #tpu.memory_space<vmem>>, vector<1x8x1xf32>
    tpu.vector_store %arg8[%c0_162, %c0_163, %c0_164], %399 {strides = array<i32>} : memref<1x8x1xf32, #tpu.memory_space<vmem>>, vector<1x8x1xf32>,
    return
  }
  func.func @transform_0(%arg0: i32, %arg1: i32) -> (i32, i32) {
    %c1_i32 = arith.constant 1 : i32
    %0 = arith.muli %arg0, %c1_i32 : i32
    %1 = arith.addi %0, %arg1 : i32
    %c0_i32 = arith.constant 0 : i32
    %2 = arith.minsi %1, %c0_i32 : i32
    %c0_i32_0 = arith.constant 0 : i32
    %c0_i32_1 = arith.constant 0 : i32
    return %2, %c0_i32_0 : i32, i32
  }
  func.func @transform_1(%arg0: i32, %arg1: i32) -> (i32, i32) {
    %c1_i32 = arith.constant 1 : i32
    %0 = arith.muli %arg0, %c1_i32 : i32
    %1 = arith.addi %0, %arg1 : i32
    %c0_i32 = arith.constant 0 : i32
    %2 = arith.minsi %1, %c0_i32 : i32
    %c0_i32_0 = arith.constant 0 : i32
    %c0_i32_1 = arith.constant 0 : i32
    return %2, %c0_i32_0 : i32, i32
  }
  func.func @transform_2(%arg0: i32, %arg1: i32) -> (i32, i32) {
    %c1_i32 = arith.constant 1 : i32
    %0 = arith.muli %arg0, %c1_i32 : i32
    %1 = arith.addi %0, %arg1 : i32
    %c0_i32 = arith.constant 0 : i32
    %2 = arith.minsi %1, %c0_i32 : i32
    %c0_i32_0 = arith.constant 0 : i32
    %c0_i32_1 = arith.constant 0 : i32
    return %2, %c0_i32_0 : i32, i32
  }
  func.func @transform_3(%arg0: i32, %arg1: i32) -> (i32, i32) {
    %c1_i32 = arith.constant 1 : i32
    %0 = arith.muli %arg0, %c1_i32 : i32
    %1 = arith.addi %0, %arg1 : i32
    %c0_i32 = arith.constant 0 : i32
    %2 = arith.minsi %1, %c0_i32 : i32
    %c0_i32_0 = arith.constant 0 : i32
    %c0_i32_1 = arith.constant 0 : i32
    return %2, %c0_i32_0 : i32, i32
  }
  func.func @transform_4(%arg0: i32, %arg1: i32) -> (i32, i32) {
    %c1_i32 = arith.constant 1 : i32
    %0 = arith.muli %arg0, %c1_i32 : i32
    %1 = arith.addi %0, %arg1 : i32
    %c0_i32 = arith.constant 0 : i32
    %2 = arith.minsi %1, %c0_i32 : i32
    %c0_i32_0 = arith.constant 0 : i32
    %c0_i32_1 = arith.constant 0 : i32
    return %2, %c0_i32_0 : i32, i32
  }
  func.func @transform_5(%arg0: i32, %arg1: i32) -> (i32, i32) {
    %c1_i32 = arith.constant 1 : i32
    %0 = arith.muli %arg0, %c1_i32 : i32
    %1 = arith.addi %0, %arg1 : i32
    %c0_i32 = arith.constant 0 : i32
    %2 = arith.minsi %1, %c0_i32 : i32
    %c0_i32_0 = arith.constant 0 : i32
    %c0_i32_1 = arith.constant 0 : i32
    return %2, %c0_i32_0 : i32, i32
  }
  func.func @transform_6(%arg0: i32, %arg1: i32) -> (i32, i32, i32) {
    %c0_i32 = arith.constant 0 : i32
    %c0_i32_0 = arith.constant 0 : i32
    %c0_i32_1 = arith.constant 0 : i32
    return %arg0, %c0_i32, %c0_i32_0 : i32, i32, i32
  }
}

</mosaic_0001>

<llo_original>
// kernel: tpu_custom_call.1
$region0: #{tpu_custom_call.1}
  #allocation0 [shape = 'u32[]', space=smem, size = 0x4, offset = 0x4, fixed_abs, tag = 'smem constant byte address 0x4 - core index']
  #allocation1 [shape = 'u32[144,128]{1,0:T(1,128)}', space=vmem, size = 0x12000, scoped, tag = 'internal scratch']
  %s0 = inlined_call_operand.hbm [shape: f32[2,3072], index: 0, kind: input, shape index: {}]
  %s1 = inlined_call_operand.hbm [shape: f32[2,3072], index: 1, kind: input, shape index: {}]
  %s2 = inlined_call_operand.hbm [shape: f32[2,3072], index: 2, kind: input, shape index: {}]
  %s3 = inlined_call_operand.vmem [shape: f32[2,32], index: 3, kind: input, shape index: {}]
  %s4 = inlined_call_operand.vmem [shape: f32[2,32], index: 4, kind: input, shape index: {}]
  %s5 = inlined_call_operand.vmem [shape: f32[2,32], index: 5, kind: input, shape index: {}]
  %s6 = inlined_call_operand.vmem [shape: f32[1,8,1], index: 6, kind: output, shape index: {}]
  %s7 = sld [smem:[#allocation0]]
  $region50: #{tpu_custom_call.1} parent=0
    _
  %s9 = ssub.s32 1, %s7
  %s10 = scalar_select 0, %s9, %s7
  $region1: #{tpu_custom_call.1} parent=0
    #allocation2 [shape = 'u8[98304]{0}', space=vmem, size = 0x18000, scoped, tag = 'input window, operand 0, single buffered']
    #allocation3 [shape = 's32[1]{0}', space=sflag, size = 0x4, scoped, tag = 'scoped memory for tpu_custom_call.1']
    #allocation4 [shape = 'u8[98304]{0}', space=vmem, size = 0x18000, scoped, tag = 'input window, operand 1, single buffered']
    #allocation5 [shape = 's32[1]{0}', space=sflag, size = 0x4, scoped, tag = 'scoped memory for tpu_custom_call.1']
    #allocation6 [shape = 'u8[98304]{0}', space=vmem, size = 0x18000, scoped, tag = 'input window, operand 2, single buffered']
    %11 = vsyncpa [#allocation3], 0
    %12 = vsyncpa [#allocation5], 0
    // Predicated region
    $region2: #{tpu_custom_call.1} parent=1 // pred_check
      _
    $region3: #{tpu_custom_call.1} parent=1 // pred_check_branch
      %14 = sbr.rel (0) target = $region5
    $region4: #{tpu_custom_call.1} parent=1 // pred_region
      %s15 = sadd.s32 0, 0
      %p16 = scmp.lt.s32.totalorder %s15, 0
      %s17 = scalar_select %p16, %s15, 0
      %s18 = smul.u32 4, %s17
      %s19 = ssub.s32 1, %s18
      %s20 = smul.u32 32, %s19
      %s21 = smul.u32 %s20, 24
      %s23 = ssub.s32 3072, %s21
      %24 = vsyncadd [#allocation3], %s23
      %p25 = scmp.ne.s32.totalorder 0, %s21
      %s26 = smul.addr %s18, 24
      %s27 = smul.addr %s26, 32
      %s28 = scalar_lea.hbm %s0, %s27
      %s29 = smul.u32 48, %s19
      %s30 = sshll.u32 [#allocation2], 4
      %s31 = int_to_ptr.vmem [resolvable:$true] %s30
      %s32 = sshll.u32 %s29, 4
      %36 = dma.hbm_to_vmem [thread:$0]  (%p25), %s28, %s32, %s31, [#allocation3], 768, 768, 48
    $region5: #{tpu_custom_call.1} parent=1 // pred_fallthru
      _
    // Predicated region
    $region6: #{tpu_custom_call.1} parent=1 // pred_check
      _
    $region7: #{tpu_custom_call.1} parent=1 // pred_check_branch
      %38 = sbr.rel (0) target = $region9
    $region8: #{tpu_custom_call.1} parent=1 // pred_region
      %s39 = sadd.s32 0, 0
      %p40 = scmp.lt.s32.totalorder %s39, 0
      %s41 = scalar_select %p40, %s39, 0
      %s42 = smul.u32 4, %s41
      %s43 = ssub.s32 1, %s42
      %s44 = smul.u32 32, %s43
      %s45 = smul.u32 %s44, 24
      %s47 = ssub.s32 3072, %s45
      %48 = vsyncadd [#allocation5], %s47
      %p49 = scmp.ne.s32.totalorder 0, %s45
      %s50 = smul.addr %s42, 24
      %s51 = smul.addr %s50, 32
      %s52 = scalar_lea.hbm %s1, %s51
      %s53 = smul.u32 48, %s43
      %s54 = sshll.u32 [#allocation4], 4
      %s55 = int_to_ptr.vmem [resolvable:$true] %s54
      %s56 = sshll.u32 %s53, 4
      %60 = dma.hbm_to_vmem [thread:$0]  (%p49), %s52, %s56, %s55, [#allocation5], 768, 768, 48
    $region9: #{tpu_custom_call.1} parent=1 // pred_fallthru
      _
    // Predicated region
    $region10: #{tpu_custom_call.1} parent=1 // pred_check
      _
    $region11: #{tpu_custom_call.1} parent=1 // pred_check_branch
      %62 = sbr.rel (0) target = $region13
    $region12: #{tpu_custom_call.1} parent=1 // pred_region
      %s63 = sadd.s32 0, 0
      %p64 = scmp.lt.s32.totalorder %s63, 0
      %s65 = scalar_select %p64, %s63, 0
      %s66 = smul.u32 4, %s65
      %s67 = ssub.s32 1, %s66
      %s68 = smul.u32 32, %s67
      %s69 = smul.u32 %s68, 24
      %s71 = ssub.s32 3072, %s69
      %72 = vsyncadd [#allocation5], %s71
      %p73 = scmp.ne.s32.totalorder 0, %s69
      %s74 = smul.addr %s66, 24
      %s75 = smul.addr %s74, 32
      %s76 = scalar_lea.hbm %s2, %s75
      %s77 = smul.u32 48, %s67
      %s78 = sshll.u32 [#allocation6], 4
      %s79 = int_to_ptr.vmem [resolvable:$true] %s78
      %s80 = sshll.u32 %s77, 4
      %84 = dma.hbm_to_vmem [thread:$0]  (%p73), %s76, %s80, %s79, [#allocation5], 768, 768, 48
    $region13: #{tpu_custom_call.1} parent=1 // pred_fallthru
      _
    // Predicated region
    $region14: #{tpu_custom_call.1} parent=1 // pred_check
      _
    $region15: #{tpu_custom_call.1} parent=1 // pred_check_branch
      %86 = sbr.rel (0) target = $region17
    $region16: #{tpu_custom_call.1} parent=1 // pred_region
      %s87 = sadd.s32 0, 0
      %p88 = scmp.lt.s32.totalorder %s87, 0
      %s89 = scalar_select %p88, %s87, 0
      %s90 = smul.u32 4, %s89
      %s91 = ssub.s32 1, %s90
      %s92 = smul.u32 32, %s91
      %p93 = scmp.lt.s32.totalorder %s90, 0
      %s94 = scalar_select %p93, %s90, 0
      %s95 = smul.addr %s94, 2
      %s96 = scalar_lea.vmem %s3, %s95
      %s97 = sadd.s32 0, 0
      %p98 = scmp.lt.s32.totalorder %s97, 0
      %s99 = scalar_select %p98, %s97, 0
      %s100 = smul.u32 4, %s99
      %s101 = ssub.s32 1, %s100
      %s102 = smul.u32 32, %s101
    $region17: #{tpu_custom_call.1} parent=1 // pred_fallthru
      _
    // Predicated region
    $region18: #{tpu_custom_call.1} parent=1 // pred_check
      _
    $region19: #{tpu_custom_call.1} parent=1 // pred_check_branch
      %104 = sbr.rel (0) target = $region21
    $region20: #{tpu_custom_call.1} parent=1 // pred_region
      %s105 = sadd.s32 0, 0
      %p106 = scmp.lt.s32.totalorder %s105, 0
      %s107 = scalar_select %p106, %s105, 0
      %s108 = smul.u32 4, %s107
      %s109 = ssub.s32 1, %s108
      %s110 = smul.u32 32, %s109
      %p111 = scmp.lt.s32.totalorder %s108, 0
      %s112 = scalar_select %p111, %s108, 0
      %s113 = smul.addr %s112, 2
      %s114 = scalar_lea.vmem %s4, %s113
      %s115 = sadd.s32 0, 0
      %p116 = scmp.lt.s32.totalorder %s115, 0
      %s117 = scalar_select %p116, %s115, 0
      %s118 = smul.u32 4, %s117
      %s119 = ssub.s32 1, %s118
      %s120 = smul.u32 32, %s119
    $region21: #{tpu_custom_call.1} parent=1 // pred_fallthru
      _
    // Predicated region
    $region22: #{tpu_custom_call.1} parent=1 // pred_check
      _
    $region23: #{tpu_custom_call.1} parent=1 // pred_check_branch
      %122 = sbr.rel (0) target = $region25
    $region24: #{tpu_custom_call.1} parent=1 // pred_region
      %s123 = sadd.s32 0, 0
      %p124 = scmp.lt.s32.totalorder %s123, 0
      %s125 = scalar_select %p124, %s123, 0
      %s126 = smul.u32 4, %s125
      %s127 = ssub.s32 1, %s126
      %s128 = smul.u32 32, %s127
      %p129 = scmp.lt.s32.totalorder %s126, 0
      %s130 = scalar_select %p129, %s126, 0
      %s131 = smul.addr %s130, 2
      %s132 = scalar_lea.vmem %s5, %s131
      %s133 = sadd.s32 0, 0
      %p134 = scmp.lt.s32.totalorder %s133, 0
      %s135 = scalar_select %p134, %s133, 0
      %s136 = smul.u32 4, %s135
      %s137 = ssub.s32 1, %s136
      %s138 = smul.u32 32, %s137
    $region25: #{tpu_custom_call.1} parent=1 // pred_fallthru
      _
    // Predicated region
    $region26: #{tpu_custom_call.1} parent=1 // pred_check
      _
    $region27: #{tpu_custom_call.1} parent=1 // pred_check_branch
      %140 = sbr.rel (0) target = $region29
    $region28: #{tpu_custom_call.1} parent=1 // pred_region
      %141 = dma.done [#allocation3], 3072
    $region29: #{tpu_custom_call.1} parent=1 // pred_fallthru
      _
    // Predicated region
    $region30: #{tpu_custom_call.1} parent=1 // pred_check
      _
    $region31: #{tpu_custom_call.1} parent=1 // pred_check_branch
      %143 = sbr.rel (0) target = $region33
    $region32: #{tpu_custom_call.1} parent=1 // pred_region
      %144 = dma.done [#allocation5], 3072
    $region33: #{tpu_custom_call.1} parent=1 // pred_fallthru
      _
    // Predicated region
    $region34: #{tpu_custom_call.1} parent=1 // pred_check
      _
    $region35: #{tpu_custom_call.1} parent=1 // pred_check_branch
      %146 = sbr.rel (0) target = $region37
    $region36: #{tpu_custom_call.1} parent=1 // pred_region
      %147 = dma.done [#allocation5], 3072
    $region37: #{tpu_custom_call.1} parent=1 // pred_fallthru
      _
    %s148 = sadd.s32 0, 0
    %p149 = scmp.lt.s32.totalorder %s148, 0
    %s150 = scalar_select %p149, %s148, 0
    %s151 = smul.u32 4, %s150
    %s152 = ssub.s32 1, %s151
    %s153 = smul.u32 32, %s152
    %p154 = scmp.lt.s32.totalorder %s151, 0
    %s155 = scalar_select %p154, %s151, 0
    %s156 = smul.addr %s155, 2
    %s157 = scalar_lea.vmem %s3, %s156
    %s158 = sadd.s32 0, 0
    %p159 = scmp.lt.s32.totalorder %s158, 0
    %s160 = scalar_select %p159, %s158, 0
    %s161 = smul.u32 4, %s160
    %s162 = ssub.s32 1, %s161
    %s163 = smul.u32 32, %s162
    %p164 = scmp.lt.s32.totalorder %s161, 0
    %s165 = scalar_select %p164, %s161, 0
    %s166 = smul.addr %s165, 2
    %s167 = scalar_lea.vmem %s4, %s166
    %s168 = sadd.s32 0, 0
    %p169 = scmp.lt.s32.totalorder %s168, 0
    %s170 = scalar_select %p169, %s168, 0
    %s171 = smul.u32 4, %s170
    %s172 = ssub.s32 1, %s171
    %s173 = smul.u32 32, %s172
    %p174 = scmp.lt.s32.totalorder %s171, 0
    %s175 = scalar_select %p174, %s171, 0
    %s176 = smul.addr %s175, 2
    %s177 = scalar_lea.vmem %s5, %s176
    %s178 = sadd.s32 0, 0
    %p179 = scmp.lt.s32.totalorder %s178, 0
    %s180 = scalar_select %p179, %s178, 0
    %s181 = smul.u32 4, %s180
    %s182 = ssub.s32 1, %s181
    %s183 = smul.u32 32, %s182
    %s184 = smul.u32 %s183, 24
    %s185 = sadd.s32 0, 0
    %p186 = scmp.lt.s32.totalorder %s185, 0
    %s187 = scalar_select %p186, %s185, 0
    %s188 = smul.u32 4, %s187
    %s189 = ssub.s32 1, %s188
    %s190 = smul.u32 32, %s189
    %s191 = smul.u32 %s190, 24
    %s192 = sadd.s32 0, 0
    %p193 = scmp.lt.s32.totalorder %s192, 0
    %s194 = scalar_select %p193, %s192, 0
    %s195 = smul.u32 4, %s194
    %s196 = ssub.s32 1, %s195
    %s197 = smul.u32 32, %s196
    %s198 = smul.u32 %s197, 24
    %s199 = sadd.s32 0, 0
    %p200 = scmp.lt.s32.totalorder %s199, 0
    %s201 = scalar_select %p200, %s199, 0
    %s202 = smul.u32 4, %s201
    %s203 = ssub.s32 1, %s202
    %s204 = smul.u32 32, %s203
    %p205 = scmp.lt.s32.totalorder %s202, 0
    %s206 = scalar_select %p205, %s202, 0
    %s207 = smul.addr %s206, 2
    %s208 = scalar_lea.vmem %s3, %s207
    %s209 = sadd.s32 0, 0
    %p210 = scmp.lt.s32.totalorder %s209, 0
    %s211 = scalar_select %p210, %s209, 0
    %s212 = smul.u32 4, %s211
    %s213 = ssub.s32 1, %s212
    %s214 = smul.u32 32, %s213
    %s215 = sadd.s32 0, 0
    %p216 = scmp.lt.s32.totalorder %s215, 0
    %s217 = scalar_select %p216, %s215, 0
    %s218 = smul.u32 4, %s217
    %s219 = ssub.s32 1, %s218
    %s220 = smul.u32 32, %s219
    %p221 = scmp.lt.s32.totalorder %s218, 0
    %s222 = scalar_select %p221, %s218, 0
    %s223 = smul.addr %s222, 2
    %s224 = scalar_lea.vmem %s4, %s223
    %s225 = sadd.s32 0, 0
    %p226 = scmp.lt.s32.totalorder %s225, 0
    %s227 = scalar_select %p226, %s225, 0
    %s228 = smul.u32 4, %s227
    %s229 = ssub.s32 1, %s228
    %s230 = smul.u32 32, %s229
    %s231 = sadd.s32 0, 0
    %p232 = scmp.lt.s32.totalorder %s231, 0
    %s233 = scalar_select %p232, %s231, 0
    %s234 = smul.u32 4, %s233
    %s235 = ssub.s32 1, %s234
    %s236 = smul.u32 32, %s235
    %p237 = scmp.lt.s32.totalorder %s234, 0
    %s238 = scalar_select %p237, %s234, 0
    %s239 = smul.addr %s238, 2
    %s240 = scalar_lea.vmem %s5, %s239
    %s241 = sadd.s32 0, 0
    %p242 = scmp.lt.s32.totalorder %s241, 0
    %s243 = scalar_select %p242, %s241, 0
    %s244 = smul.u32 4, %s243
    %s245 = ssub.s32 1, %s244
    %s246 = smul.u32 32, %s245
    %p247 = scmp.eq.s32.totalorder 0, 0
    // Predicated region
    $region38: #{tpu_custom_call.1} parent=1 // pred_check
      %p248 = pneg %p247
    $region39: #{tpu_custom_call.1} parent=1 // pred_check_branch
      %250 = sbr.rel (%p248) target = $region41
    $region40: #{tpu_custom_call.1} parent=1 // pred_region
      %vm251 = vcmask 7168
      %252 = vst.msk [vmem:[%s6] sm:$0xff] %vm251, 0.0
    $region41: #{tpu_custom_call.1} parent=1 // pred_fallthru
      _
    %v253 = vld [vmem:[#allocation2] sm:$0xf]
    %v254 = vld [vmem:[#allocation2 + $0x30] sm:$0xf]
    %v255 = vld [vmem:[#allocation2 + $0x60] sm:$0xf]
    %v256 = vld [vmem:[#allocation2 + $0x90] sm:$0xf]
    %v257 = vld [vmem:[#allocation4] sm:$0xf]
    %v258 = vld [vmem:[#allocation4 + $0x30] sm:$0xf]
    %v259 = vld [vmem:[#allocation4 + $0x60] sm:$0xf]
    %v260 = vld [vmem:[#allocation4 + $0x90] sm:$0xf]
    %v261 = vsub.f32 %v253, %v257
    %v262 = vsub.f32 %v254, %v258
    %v263 = vsub.f32 %v255, %v259
    %v264 = vsub.f32 %v256, %v260
    %v265 = vand.u32 2147483647, %v261
    %v266 = vand.u32 2147483647, %v262
    %v267 = vand.u32 2147483647, %v263
    %v268 = vand.u32 2147483647, %v264
    %v269 = vadd.f32 %v265, 1e-06
    %v270 = vadd.f32 %v266, 1e-06
    %v271 = vadd.f32 %v267, 1e-06
    %v272 = vadd.f32 %v268, 1e-06
    %v273 = vmul.f32 %v269, %v269
    %v274 = vmul.f32 %v270, %v270
    %v275 = vmul.f32 %v271, %v271
    %v276 = vmul.f32 %v272, %v272
    %v281 = vcombine.low %v273, %v274
    %v282 = vcombine.low %v275, %v276
    %v284 = vunpack.c.l.s4 1983009808
    %v285 = vunpack.c.0.s8 %v284
    %v286 = vlaneseq
    %v287 = vshrl.u32 %v286, 7
    %v288 = vsub.s32 %v285, %v287
    %v289 = vrot.slane %v281, %v288
    %v291 = vunpack.c.l.s4 1983009808
    %v292 = vunpack.c.0.s8 %v291
    %v293 = vlaneseq
    %v294 = vshrl.u32 %v293, 7
    %v295 = vsub.s32 %v292, %v294
    %v296 = vrot.slane %v282, %v295
    %v297 = vcombine.low %v289, %v296
    %v298 = vcombine.high %v289, %v296
    %v301 = vadd.f32 %v297, %v298
    %302 = vadd.xlane.f32.xlu0 %v301
    %v303 = vpop.xlane.xlu0 %302
    %v304 = vadd.f32 %v303, 0.0
    %s305 = scalar_lea.vmem [#allocation2], 4
    %v306 = vld [vmem:[%s305] sm:$0xf]
    %v307 = vld [vmem:[%s305 + $0x30] sm:$0xf]
    %v308 = vld [vmem:[%s305 + $0x60] sm:$0xf]
    %v309 = vld [vmem:[%s305 + $0x90] sm:$0xf]
    %s310 = scalar_lea.vmem [#allocation4], 4
    %v311 = vld [vmem:[%s310] sm:$0xf]
    %v312 = vld [vmem:[%s310 + $0x30] sm:$0xf]
    %v313 = vld [vmem:[%s310 + $0x60] sm:$0xf]
    %v314 = vld [vmem:[%s310 + $0x90] sm:$0xf]
    %v315 = vsub.f32 %v306, %v311
    %v316 = vsub.f32 %v307, %v312
    %v317 = vsub.f32 %v308, %v313
    %v318 = vsub.f32 %v309, %v314
    %v319 = vand.u32 2147483647, %v315
    %v320 = vand.u32 2147483647, %v316
    %v321 = vand.u32 2147483647, %v317
    %v322 = vand.u32 2147483647, %v318
    %v323 = vadd.f32 %v319, 1e-06
    %v324 = vadd.f32 %v320, 1e-06
    %v325 = vadd.f32 %v321, 1e-06
    %v326 = vadd.f32 %v322, 1e-06
    %v327 = vmul.f32 %v323, %v323
    %v328 = vmul.f32 %v324, %v324
    %v329 = vmul.f32 %v325, %v325
    %v330 = vmul.f32 %v326, %v326
    %v335 = vcombine.low %v327, %v328
    %v336 = vcombine.low %v329, %v330
    %v338 = vunpack.c.l.s4 1983009808
    %v339 = vunpack.c.0.s8 %v338
    %v340 = vlaneseq
    %v341 = vshrl.u32 %v340, 7
    %v342 = vsub.s32 %v339, %v341
    %v343 = vrot.slane %v335, %v342
    %v345 = vunpack.c.l.s4 1983009808
    %v346 = vunpack.c.0.s8 %v345
    %v347 = vlaneseq
    %v348 = vshrl.u32 %v347, 7
    %v349 = vsub.s32 %v346, %v348
    %v350 = vrot.slane %v336, %v349
    %v351 = vcombine.low %v343, %v350
    %v352 = vcombine.high %v343, %v350
    %v355 = vadd.f32 %v351, %v352
    %356 = vadd.xlane.f32.xlu0 %v355
    %v357 = vpop.xlane.xlu0 %356
    %v358 = vadd.f32 %v304, %v357
    %s359 = scalar_lea.vmem [#allocation2], 8
    %v360 = vld [vmem:[%s359] sm:$0xf]
    %v361 = vld [vmem:[%s359 + $0x30] sm:$0xf]
    %v362 = vld [vmem:[%s359 + $0x60] sm:$0xf]
    %v363 = vld [vmem:[%s359 + $0x90] sm:$0xf]
    %s364 = scalar_lea.vmem [#allocation4], 8
    %v365 = vld [vmem:[%s364] sm:$0xf]
    %v366 = vld [vmem:[%s364 + $0x30] sm:$0xf]
    %v367 = vld [vmem:[%s364 + $0x60] sm:$0xf]
    %v368 = vld [vmem:[%s364 + $0x90] sm:$0xf]
    %v369 = vsub.f32 %v360, %v365
    %v370 = vsub.f32 %v361, %v366
    %v371 = vsub.f32 %v362, %v367
    %v372 = vsub.f32 %v363, %v368
    %v373 = vand.u32 2147483647, %v369
    %v374 = vand.u32 2147483647, %v370
    %v375 = vand.u32 2147483647, %v371
    %v376 = vand.u32 2147483647, %v372
    %v377 = vadd.f32 %v373, 1e-06
    %v378 = vadd.f32 %v374, 1e-06
    %v379 = vadd.f32 %v375, 1e-06
    %v380 = vadd.f32 %v376, 1e-06
    %v381 = vmul.f32 %v377, %v377
    %v382 = vmul.f32 %v378, %v378
    %v383 = vmul.f32 %v379, %v379
    %v384 = vmul.f32 %v380, %v380
    %v389 = vcombine.low %v381, %v382
    %v390 = vcombine.low %v383, %v384
    %v392 = vunpack.c.l.s4 1983009808
    %v393 = vunpack.c.0.s8 %v392
    %v394 = vlaneseq
    %v395 = vshrl.u32 %v394, 7
    %v396 = vsub.s32 %v393, %v395
    %v397 = vrot.slane %v389, %v396
    %v399 = vunpack.c.l.s4 1983009808
    %v400 = vunpack.c.0.s8 %v399
    %v401 = vlaneseq
    %v402 = vshrl.u32 %v401, 7
    %v403 = vsub.s32 %v400, %v402
    %v404 = vrot.slane %v390, %v403
    %v405 = vcombine.low %v397, %v404
    %v406 = vcombine.high %v397, %v404
    %v409 = vadd.f32 %v405, %v406
    %410 = vadd.xlane.f32.xlu0 %v409
    %v411 = vpop.xlane.xlu0 %410
    %v412 = vadd.f32 %v358, %v411
    %s413 = scalar_lea.vmem [#allocation2], 12
    %v414 = vld [vmem:[%s413] sm:$0xf]
    %v415 = vld [vmem:[%s413 + $0x30] sm:$0xf]
    %v416 = vld [vmem:[%s413 + $0x60] sm:$0xf]
    %v417 = vld [vmem:[%s413 + $0x90] sm:$0xf]
    %s418 = scalar_lea.vmem [#allocation4], 12
    %v419 = vld [vmem:[%s418] sm:$0xf]
    %v420 = vld [vmem:[%s418 + $0x30] sm:$0xf]
    %v421 = vld [vmem:[%s418 + $0x60] sm:$0xf]
    %v422 = vld [vmem:[%s418 + $0x90] sm:$0xf]
    %v423 = vsub.f32 %v414, %v419
    %v424 = vsub.f32 %v415, %v420
    %v425 = vsub.f32 %v416, %v421
    %v426 = vsub.f32 %v417, %v422
    %v427 = vand.u32 2147483647, %v423
    %v428 = vand.u32 2147483647, %v424
    %v429 = vand.u32 2147483647, %v425
    %v430 = vand.u32 2147483647, %v426
    %v431 = vadd.f32 %v427, 1e-06
    %v432 = vadd.f32 %v428, 1e-06
    %v433 = vadd.f32 %v429, 1e-06
    %v434 = vadd.f32 %v430, 1e-06
    %v435 = vmul.f32 %v431, %v431
    %v436 = vmul.f32 %v432, %v432
    %v437 = vmul.f32 %v433, %v433
    %v438 = vmul.f32 %v434, %v434
    %v443 = vcombine.low %v435, %v436
    %v444 = vcombine.low %v437, %v438
    %v446 = vunpack.c.l.s4 1983009808
    %v447 = vunpack.c.0.s8 %v446
    %v448 = vlaneseq
    %v449 = vshrl.u32 %v448, 7
    %v450 = vsub.s32 %v447, %v449
    %v451 = vrot.slane %v443, %v450
    %v453 = vunpack.c.l.s4 1983009808
    %v454 = vunpack.c.0.s8 %v453
    %v455 = vlaneseq
    %v456 = vshrl.u32 %v455, 7
    %v457 = vsub.s32 %v454, %v456
    %v458 = vrot.slane %v444, %v457
    %v459 = vcombine.low %v451, %v458
    %v460 = vcombine.high %v451, %v458
    %v463 = vadd.f32 %v459, %v460
    %464 = vadd.xlane.f32.xlu0 %v463
    %v465 = vpop.xlane.xlu0 %464
    %v466 = vadd.f32 %v412, %v465
    %s467 = scalar_lea.vmem [#allocation2], 16
    %v468 = vld [vmem:[%s467] sm:$0xf]
    %v469 = vld [vmem:[%s467 + $0x30] sm:$0xf]
    %v470 = vld [vmem:[%s467 + $0x60] sm:$0xf]
    %v471 = vld [vmem:[%s467 + $0x90] sm:$0xf]
    %s472 = scalar_lea.vmem [#allocation4], 16
    %v473 = vld [vmem:[%s472] sm:$0xf]
    %v474 = vld [vmem:[%s472 + $0x30] sm:$0xf]
    %v475 = vld [vmem:[%s472 + $0x60] sm:$0xf]
    %v476 = vld [vmem:[%s472 + $0x90] sm:$0xf]
    %v477 = vsub.f32 %v468, %v473
    %v478 = vsub.f32 %v469, %v474
    %v479 = vsub.f32 %v470, %v475
    %v480 = vsub.f32 %v471, %v476
    %v481 = vand.u32 2147483647, %v477
    %v482 = vand.u32 2147483647, %v478
    %v483 = vand.u32 2147483647, %v479
    %v484 = vand.u32 2147483647, %v480
    %v485 = vadd.f32 %v481, 1e-06
    %v486 = vadd.f32 %v482, 1e-06
    %v487 = vadd.f32 %v483, 1e-06
    %v488 = vadd.f32 %v484, 1e-06
    %v489 = vmul.f32 %v485, %v485
    %v490 = vmul.f32 %v486, %v486
    %v491 = vmul.f32 %v487, %v487
    %v492 = vmul.f32 %v488, %v488
    %v497 = vcombine.low %v489, %v490
    %v498 = vcombine.low %v491, %v492
    %v500 = vunpack.c.l.s4 1983009808
    %v501 = vunpack.c.0.s8 %v500
    %v502 = vlaneseq
    %v503 = vshrl.u32 %v502, 7
    %v504 = vsub.s32 %v501, %v503
    %v505 = vrot.slane %v497, %v504
    %v507 = vunpack.c.l.s4 1983009808
    %v508 = vunpack.c.0.s8 %v507
    %v509 = vlaneseq
    %v510 = vshrl.u32 %v509, 7
    %v511 = vsub.s32 %v508, %v510
    %v512 = vrot.slane %v498, %v511
    %v513 = vcombine.low %v505, %v512
    %v514 = vcombine.high %v505, %v512
    %v517 = vadd.f32 %v513, %v514
    %518 = vadd.xlane.f32.xlu0 %v517
    %v519 = vpop.xlane.xlu0 %518
    %v520 = vadd.f32 %v466, %v519
    %s521 = scalar_lea.vmem [#allocation2], 20
    %v522 = vld [vmem:[%s521] sm:$0xf]
    %v523 = vld [vmem:[%s521 + $0x30] sm:$0xf]
    %v524 = vld [vmem:[%s521 + $0x60] sm:$0xf]
    %v525 = vld [vmem:[%s521 + $0x90] sm:$0xf]
    %s526 = scalar_lea.vmem [#allocation4], 20
    %v527 = vld [vmem:[%s526] sm:$0xf]
    %v528 = vld [vmem:[%s526 + $0x30] sm:$0xf]
    %v529 = vld [vmem:[%s526 + $0x60] sm:$0xf]
    %v530 = vld [vmem:[%s526 + $0x90] sm:$0xf]
    %v531 = vsub.f32 %v522, %v527
    %v532 = vsub.f32 %v523, %v528
    %v533 = vsub.f32 %v524, %v529
    %v534 = vsub.f32 %v525, %v530
    %v535 = vand.u32 2147483647, %v531
    %v536 = vand.u32 2147483647, %v532
    %v537 = vand.u32 2147483647, %v533
    %v538 = vand.u32 2147483647, %v534
    %v539 = vadd.f32 %v535, 1e-06
    %v540 = vadd.f32 %v536, 1e-06
    %v541 = vadd.f32 %v537, 1e-06
    %v542 = vadd.f32 %v538, 1e-06
    %v543 = vmul.f32 %v539, %v539
    %v544 = vmul.f32 %v540, %v540
    %v545 = vmul.f32 %v541, %v541
    %v546 = vmul.f32 %v542, %v542
    %v551 = vcombine.low %v543, %v544
    %v552 = vcombine.low %v545, %v546
    %v554 = vunpack.c.l.s4 1983009808
    %v555 = vunpack.c.0.s8 %v554
    %v556 = vlaneseq
    %v557 = vshrl.u32 %v556, 7
    %v558 = vsub.s32 %v555, %v557
    %v559 = vrot.slane %v551, %v558
    %v561 = vunpack.c.l.s4 1983009808
    %v562 = vunpack.c.0.s8 %v561
    %v563 = vlaneseq
    %v564 = vshrl.u32 %v563, 7
    %v565 = vsub.s32 %v562, %v564
    %v566 = vrot.slane %v552, %v565
    %v567 = vcombine.low %v559, %v566
    %v568 = vcombine.high %v559, %v566
    %v571 = vadd.f32 %v567, %v568
    %572 = vadd.xlane.f32.xlu0 %v571
    %v573 = vpop.xlane.xlu0 %572
    %v574 = vadd.f32 %v520, %v573
    %s575 = scalar_lea.vmem [#allocation2], 24
    %v576 = vld [vmem:[%s575] sm:$0xf]
    %v577 = vld [vmem:[%s575 + $0x30] sm:$0xf]
    %v578 = vld [vmem:[%s575 + $0x60] sm:$0xf]
    %v579 = vld [vmem:[%s575 + $0x90] sm:$0xf]
    %s580 = scalar_lea.vmem [#allocation4], 24
    %v581 = vld [vmem:[%s580] sm:$0xf]
    %v582 = vld [vmem:[%s580 + $0x30] sm:$0xf]
    %v583 = vld [vmem:[%s580 + $0x60] sm:$0xf]
    %v584 = vld [vmem:[%s580 + $0x90] sm:$0xf]
    %v585 = vsub.f32 %v576, %v581
    %v586 = vsub.f32 %v577, %v582
    %v587 = vsub.f32 %v578, %v583
    %v588 = vsub.f32 %v579, %v584
    %v589 = vand.u32 2147483647, %v585
    %v590 = vand.u32 2147483647, %v586
    %v591 = vand.u32 2147483647, %v587
    %v592 = vand.u32 2147483647, %v588
    %v593 = vadd.f32 %v589, 1e-06
    %v594 = vadd.f32 %v590, 1e-06
    %v595 = vadd.f32 %v591, 1e-06
    %v596 = vadd.f32 %v592, 1e-06
    %v597 = vmul.f32 %v593, %v593
    %v598 = vmul.f32 %v594, %v594
    %v599 = vmul.f32 %v595, %v595
    %v600 = vmul.f32 %v596, %v596
    %v605 = vcombine.low %v597, %v598
    %v606 = vcombine.low %v599, %v600
    %v608 = vunpack.c.l.s4 1983009808
    %v609 = vunpack.c.0.s8 %v608
    %v610 = vlaneseq
    %v611 = vshrl.u32 %v610, 7
    %v612 = vsub.s32 %v609, %v611
    %v613 = vrot.slane %v605, %v612
    %v615 = vunpack.c.l.s4 1983009808
    %v616 = vunpack.c.0.s8 %v615
    %v617 = vlaneseq
    %v618 = vshrl.u32 %v617, 7
    %v619 = vsub.s32 %v616, %v618
    %v620 = vrot.slane %v606, %v619
    %v621 = vcombine.low %v613, %v620
    %v622 = vcombine.high %v613, %v620
    %v625 = vadd.f32 %v621, %v622
    %626 = vadd.xlane.f32.xlu0 %v625
    %v627 = vpop.xlane.xlu0 %626
    %v628 = vadd.f32 %v574, %v627
    %s629 = scalar_lea.vmem [#allocation2], 28
    %v630 = vld [vmem:[%s629] sm:$0xf]
    %v631 = vld [vmem:[%s629 + $0x30] sm:$0xf]
    %v632 = vld [vmem:[%s629 + $0x60] sm:$0xf]
    %v633 = vld [vmem:[%s629 + $0x90] sm:$0xf]
    %s634 = scalar_lea.vmem [#allocation4], 28
    %v635 = vld [vmem:[%s634] sm:$0xf]
    %v636 = vld [vmem:[%s634 + $0x30] sm:$0xf]
    %v637 = vld [vmem:[%s634 + $0x60] sm:$0xf]
    %v638 = vld [vmem:[%s634 + $0x90] sm:$0xf]
    %v639 = vsub.f32 %v630, %v635
    %v640 = vsub.f32 %v631, %v636
    %v641 = vsub.f32 %v632, %v637
    %v642 = vsub.f32 %v633, %v638
    %v643 = vand.u32 2147483647, %v639
    %v644 = vand.u32 2147483647, %v640
    %v645 = vand.u32 2147483647, %v641
    %v646 = vand.u32 2147483647, %v642
    %v647 = vadd.f32 %v643, 1e-06
    %v648 = vadd.f32 %v644, 1e-06
    %v649 = vadd.f32 %v645, 1e-06
    %v650 = vadd.f32 %v646, 1e-06
    %v651 = vmul.f32 %v647, %v647
    %v652 = vmul.f32 %v648, %v648
    %v653 = vmul.f32 %v649, %v649
    %v654 = vmul.f32 %v650, %v650
    %v659 = vcombine.low %v651, %v652
    %v660 = vcombine.low %v653, %v654
    %v662 = vunpack.c.l.s4 1983009808
    %v663 = vunpack.c.0.s8 %v662
    %v664 = vlaneseq
    %v665 = vshrl.u32 %v664, 7
    %v666 = vsub.s32 %v663, %v665
    %v667 = vrot.slane %v659, %v666
    %v669 = vunpack.c.l.s4 1983009808
    %v670 = vunpack.c.0.s8 %v669
    %v671 = vlaneseq
    %v672 = vshrl.u32 %v671, 7
    %v673 = vsub.s32 %v670, %v672
    %v674 = vrot.slane %v660, %v673
    %v675 = vcombine.low %v667, %v674
    %v676 = vcombine.high %v667, %v674
    %v679 = vadd.f32 %v675, %v676
    %680 = vadd.xlane.f32.xlu0 %v679
    %v681 = vpop.xlane.xlu0 %680
    %v682 = vadd.f32 %v628, %v681
    %s683 = scalar_lea.vmem [#allocation2], 32
    %v684 = vld [vmem:[%s683] sm:$0xf]
    %v685 = vld [vmem:[%s683 + $0x30] sm:$0xf]
    %v686 = vld [vmem:[%s683 + $0x60] sm:$0xf]
    %v687 = vld [vmem:[%s683 + $0x90] sm:$0xf]
    %s688 = scalar_lea.vmem [#allocation4], 32
    %v689 = vld [vmem:[%s688] sm:$0xf]
    %v690 = vld [vmem:[%s688 + $0x30] sm:$0xf]
    %v691 = vld [vmem:[%s688 + $0x60] sm:$0xf]
    %v692 = vld [vmem:[%s688 + $0x90] sm:$0xf]
    %v693 = vsub.f32 %v684, %v689
    %v694 = vsub.f32 %v685, %v690
    %v695 = vsub.f32 %v686, %v691
    %v696 = vsub.f32 %v687, %v692
    %v697 = vand.u32 2147483647, %v693
    %v698 = vand.u32 2147483647, %v694
    %v699 = vand.u32 2147483647, %v695
    %v700 = vand.u32 2147483647, %v696
    %v701 = vadd.f32 %v697, 1e-06
    %v702 = vadd.f32 %v698, 1e-06
    %v703 = vadd.f32 %v699, 1e-06
    %v704 = vadd.f32 %v700, 1e-06
    %v705 = vmul.f32 %v701, %v701
    %v706 = vmul.f32 %v702, %v702
    %v707 = vmul.f32 %v703, %v703
    %v708 = vmul.f32 %v704, %v704
    %v713 = vcombine.low %v705, %v706
    %v714 = vcombine.low %v707, %v708
    %v716 = vunpack.c.l.s4 1983009808
    %v717 = vunpack.c.0.s8 %v716
    %v718 = vlaneseq
    %v719 = vshrl.u32 %v718, 7
    %v720 = vsub.s32 %v717, %v719
    %v721 = vrot.slane %v713, %v720
    %v723 = vunpack.c.l.s4 1983009808
    %v724 = vunpack.c.0.s8 %v723
    %v725 = vlaneseq
    %v726 = vshrl.u32 %v725, 7
    %v727 = vsub.s32 %v724, %v726
    %v728 = vrot.slane %v714, %v727
    %v729 = vcombine.low %v721, %v728
    %v730 = vcombine.high %v721, %v728
    %v733 = vadd.f32 %v729, %v730
    %734 = vadd.xlane.f32.xlu0 %v733
    %v735 = vpop.xlane.xlu0 %734
    %v736 = vadd.f32 %v682, %v735
    %s737 = scalar_lea.vmem [#allocation2], 36
    %v738 = vld [vmem:[%s737] sm:$0xf]
    %v739 = vld [vmem:[%s737 + $0x30] sm:$0xf]
    %v740 = vld [vmem:[%s737 + $0x60] sm:$0xf]
    %v741 = vld [vmem:[%s737 + $0x90] sm:$0xf]
    %s742 = scalar_lea.vmem [#allocation4], 36
    %v743 = vld [vmem:[%s742] sm:$0xf]
    %v744 = vld [vmem:[%s742 + $0x30] sm:$0xf]
    %v745 = vld [vmem:[%s742 + $0x60] sm:$0xf]
    %v746 = vld [vmem:[%s742 + $0x90] sm:$0xf]
    %v747 = vsub.f32 %v738, %v743
    %v748 = vsub.f32 %v739, %v744
    %v749 = vsub.f32 %v740, %v745
    %v750 = vsub.f32 %v741, %v746
    %v751 = vand.u32 2147483647, %v747
    %v752 = vand.u32 2147483647, %v748
    %v753 = vand.u32 2147483647, %v749
    %v754 = vand.u32 2147483647, %v750
    %v755 = vadd.f32 %v751, 1e-06
    %v756 = vadd.f32 %v752, 1e-06
    %v757 = vadd.f32 %v753, 1e-06
    %v758 = vadd.f32 %v754, 1e-06
    %v759 = vmul.f32 %v755, %v755
    %v760 = vmul.f32 %v756, %v756
    %v761 = vmul.f32 %v757, %v757
    %v762 = vmul.f32 %v758, %v758
    %v767 = vcombine.low %v759, %v760
    %v768 = vcombine.low %v761, %v762
    %v770 = vunpack.c.l.s4 1983009808
    %v771 = vunpack.c.0.s8 %v770
    %v772 = vlaneseq
    %v773 = vshrl.u32 %v772, 7
    %v774 = vsub.s32 %v771, %v773
    %v775 = vrot.slane %v767, %v774
    %v777 = vunpack.c.l.s4 1983009808
    %v778 = vunpack.c.0.s8 %v777
    %v779 = vlaneseq
    %v780 = vshrl.u32 %v779, 7
    %v781 = vsub.s32 %v778, %v780
    %v782 = vrot.slane %v768, %v781
    %v783 = vcombine.low %v775, %v782
    %v784 = vcombine.high %v775, %v782
    %v787 = vadd.f32 %v783, %v784
    %788 = vadd.xlane.f32.xlu0 %v787
    %v789 = vpop.xlane.xlu0 %788
    %v790 = vadd.f32 %v736, %v789
    %s791 = scalar_lea.vmem [#allocation2], 40
    %v792 = vld [vmem:[%s791] sm:$0xf]
    %v793 = vld [vmem:[%s791 + $0x30] sm:$0xf]
    %v794 = vld [vmem:[%s791 + $0x60] sm:$0xf]
    %v795 = vld [vmem:[%s791 + $0x90] sm:$0xf]
    %s796 = scalar_lea.vmem [#allocation4], 40
    %v797 = vld [vmem:[%s796] sm:$0xf]
    %v798 = vld [vmem:[%s796 + $0x30] sm:$0xf]
    %v799 = vld [vmem:[%s796 + $0x60] sm:$0xf]
    %v800 = vld [vmem:[%s796 + $0x90] sm:$0xf]
    %v801 = vsub.f32 %v792, %v797
    %v802 = vsub.f32 %v793, %v798
    %v803 = vsub.f32 %v794, %v799
    %v804 = vsub.f32 %v795, %v800
    %v805 = vand.u32 2147483647, %v801
    %v806 = vand.u32 2147483647, %v802
    %v807 = vand.u32 2147483647, %v803
    %v808 = vand.u32 2147483647, %v804
    %v809 = vadd.f32 %v805, 1e-06
    %v810 = vadd.f32 %v806, 1e-06
    %v811 = vadd.f32 %v807, 1e-06
    %v812 = vadd.f32 %v808, 1e-06
    %v813 = vmul.f32 %v809, %v809
    %v814 = vmul.f32 %v810, %v810
    %v815 = vmul.f32 %v811, %v811
    %v816 = vmul.f32 %v812, %v812
    %v821 = vcombine.low %v813, %v814
    %v822 = vcombine.low %v815, %v816
    %v824 = vunpack.c.l.s4 1983009808
    %v825 = vunpack.c.0.s8 %v824
    %v826 = vlaneseq
    %v827 = vshrl.u32 %v826, 7
    %v828 = vsub.s32 %v825, %v827
    %v829 = vrot.slane %v821, %v828
    %v831 = vunpack.c.l.s4 1983009808
    %v832 = vunpack.c.0.s8 %v831
    %v833 = vlaneseq
    %v834 = vshrl.u32 %v833, 7
    %v835 = vsub.s32 %v832, %v834
    %v836 = vrot.slane %v822, %v835
    %v837 = vcombine.low %v829, %v836
    %v838 = vcombine.high %v829, %v836
    %v841 = vadd.f32 %v837, %v838
    %842 = vadd.xlane.f32.xlu0 %v841
    %v843 = vpop.xlane.xlu0 %842
    %v844 = vadd.f32 %v790, %v843
    %s845 = scalar_lea.vmem [#allocation2], 44
    %v846 = vld [vmem:[%s845] sm:$0xf]
    %v847 = vld [vmem:[%s845 + $0x30] sm:$0xf]
    %v848 = vld [vmem:[%s845 + $0x60] sm:$0xf]
    %v849 = vld [vmem:[%s845 + $0x90] sm:$0xf]
    %s850 = scalar_lea.vmem [#allocation4], 44
    %v851 = vld [vmem:[%s850] sm:$0xf]
    %v852 = vld [vmem:[%s850 + $0x30] sm:$0xf]
    %v853 = vld [vmem:[%s850 + $0x60] sm:$0xf]
    %v854 = vld [vmem:[%s850 + $0x90] sm:$0xf]
    %v855 = vsub.f32 %v846, %v851
    %v856 = vsub.f32 %v847, %v852
    %v857 = vsub.f32 %v848, %v853
    %v858 = vsub.f32 %v849, %v854
    %v859 = vand.u32 2147483647, %v855
    %v860 = vand.u32 2147483647, %v856
    %v861 = vand.u32 2147483647, %v857
    %v862 = vand.u32 2147483647, %v858
    %v863 = vadd.f32 %v859, 1e-06
    %v864 = vadd.f32 %v860, 1e-06
    %v865 = vadd.f32 %v861, 1e-06
    %v866 = vadd.f32 %v862, 1e-06
    %v867 = vmul.f32 %v863, %v863
    %v868 = vmul.f32 %v864, %v864
    %v869 = vmul.f32 %v865, %v865
    %v870 = vmul.f32 %v866, %v866
    %v875 = vcombine.low %v867, %v868
    %v876 = vcombine.low %v869, %v870
    %v878 = vunpack.c.l.s4 1983009808
    %v879 = vunpack.c.0.s8 %v878
    %v880 = vlaneseq
    %v881 = vshrl.u32 %v880, 7
    %v882 = vsub.s32 %v879, %v881
    %v883 = vrot.slane %v875, %v882
    %v885 = vunpack.c.l.s4 1983009808
    %v886 = vunpack.c.0.s8 %v885
    %v887 = vlaneseq
    %v888 = vshrl.u32 %v887, 7
    %v889 = vsub.s32 %v886, %v888
    %v890 = vrot.slane %v876, %v889
    %v891 = vcombine.low %v883, %v890
    %v892 = vcombine.high %v883, %v890
    %v895 = vadd.f32 %v891, %v892
    %896 = vadd.xlane.f32.xlu0 %v895
    %v897 = vpop.xlane.xlu0 %896
    %v898 = vadd.f32 %v844, %v897
    %v899 = vld [vmem:[#allocation6] sm:$0xf]
    %v900 = vld [vmem:[#allocation6 + $0x30] sm:$0xf]
    %v901 = vld [vmem:[#allocation6 + $0x60] sm:$0xf]
    %v902 = vld [vmem:[#allocation6 + $0x90] sm:$0xf]
    %v903 = vsub.f32 %v257, %v899
    %v904 = vsub.f32 %v258, %v900
    %v905 = vsub.f32 %v259, %v901
    %v906 = vsub.f32 %v260, %v902
    %v907 = vand.u32 2147483647, %v903
    %v908 = vand.u32 2147483647, %v904
    %v909 = vand.u32 2147483647, %v905
    %v910 = vand.u32 2147483647, %v906
    %v911 = vadd.f32 %v907, 1e-06
    %v912 = vadd.f32 %v908, 1e-06
    %v913 = vadd.f32 %v909, 1e-06
    %v914 = vadd.f32 %v910, 1e-06
    %v915 = vmul.f32 %v911, %v911
    %v916 = vmul.f32 %v912, %v912
    %v917 = vmul.f32 %v913, %v913
    %v918 = vmul.f32 %v914, %v914
    %v923 = vcombine.low %v915, %v916
    %v924 = vcombine.low %v917, %v918
    %v926 = vunpack.c.l.s4 1983009808
    %v927 = vunpack.c.0.s8 %v926
    %v928 = vlaneseq
    %v929 = vshrl.u32 %v928, 7
    %v930 = vsub.s32 %v927, %v929
    %v931 = vrot.slane %v923, %v930
    %v933 = vunpack.c.l.s4 1983009808
    %v934 = vunpack.c.0.s8 %v933
    %v935 = vlaneseq
    %v936 = vshrl.u32 %v935, 7
    %v937 = vsub.s32 %v934, %v936
    %v938 = vrot.slane %v924, %v937
    %v939 = vcombine.low %v931, %v938
    %v940 = vcombine.high %v931, %v938
    %v943 = vadd.f32 %v939, %v940
    %944 = vadd.xlane.f32.xlu0 %v943
    %v945 = vpop.xlane.xlu0 %944
    %v946 = vadd.f32 %v945, 0.0
    %s947 = scalar_lea.vmem [#allocation6], 4
    %v948 = vld [vmem:[%s947] sm:$0xf]
    %v949 = vld [vmem:[%s947 + $0x30] sm:$0xf]
    %v950 = vld [vmem:[%s947 + $0x60] sm:$0xf]
    %v951 = vld [vmem:[%s947 + $0x90] sm:$0xf]
    %v952 = vsub.f32 %v311, %v948
    %v953 = vsub.f32 %v312, %v949
    %v954 = vsub.f32 %v313, %v950
    %v955 = vsub.f32 %v314, %v951
    %v956 = vand.u32 2147483647, %v952
    %v957 = vand.u32 2147483647, %v953
    %v958 = vand.u32 2147483647, %v954
    %v959 = vand.u32 2147483647, %v955
    %v960 = vadd.f32 %v956, 1e-06
    %v961 = vadd.f32 %v957, 1e-06
    %v962 = vadd.f32 %v958, 1e-06
    %v963 = vadd.f32 %v959, 1e-06
    %v964 = vmul.f32 %v960, %v960
    %v965 = vmul.f32 %v961, %v961
    %v966 = vmul.f32 %v962, %v962
    %v967 = vmul.f32 %v963, %v963
    %v972 = vcombine.low %v964, %v965
    %v973 = vcombine.low %v966, %v967
    %v975 = vunpack.c.l.s4 1983009808
    %v976 = vunpack.c.0.s8 %v975
    %v977 = vlaneseq
    %v978 = vshrl.u32 %v977, 7
    %v979 = vsub.s32 %v976, %v978
    %v980 = vrot.slane %v972, %v979
    %v982 = vunpack.c.l.s4 1983009808
    %v983 = vunpack.c.0.s8 %v982
    %v984 = vlaneseq
    %v985 = vshrl.u32 %v984, 7
    %v986 = vsub.s32 %v983, %v985
    %v987 = vrot.slane %v973, %v986
    %v988 = vcombine.low %v980, %v987
    %v989 = vcombine.high %v980, %v987
    %v992 = vadd.f32 %v988, %v989
    %993 = vadd.xlane.f32.xlu0 %v992
    %v994 = vpop.xlane.xlu0 %993
    %v995 = vadd.f32 %v946, %v994
    %s996 = scalar_lea.vmem [#allocation6], 8
    %v997 = vld [vmem:[%s996] sm:$0xf]
    %v998 = vld [vmem:[%s996 + $0x30] sm:$0xf]
    %v999 = vld [vmem:[%s996 + $0x60] sm:$0xf]
    %v1000 = vld [vmem:[%s996 + $0x90] sm:$0xf]
    %v1001 = vsub.f32 %v365, %v997
    %v1002 = vsub.f32 %v366, %v998
    %v1003 = vsub.f32 %v367, %v999
    %v1004 = vsub.f32 %v368, %v1000
    %v1005 = vand.u32 2147483647, %v1001
    %v1006 = vand.u32 2147483647, %v1002
    %v1007 = vand.u32 2147483647, %v1003
    %v1008 = vand.u32 2147483647, %v1004
    %v1009 = vadd.f32 %v1005, 1e-06
    %v1010 = vadd.f32 %v1006, 1e-06
    %v1011 = vadd.f32 %v1007, 1e-06
    %v1012 = vadd.f32 %v1008, 1e-06
    %v1013 = vmul.f32 %v1009, %v1009
    %v1014 = vmul.f32 %v1010, %v1010
    %v1015 = vmul.f32 %v1011, %v1011
    %v1016 = vmul.f32 %v1012, %v1012
    %v1021 = vcombine.low %v1013, %v1014
    %v1022 = vcombine.low %v1015, %v1016
    %v1024 = vunpack.c.l.s4 1983009808
    %v1025 = vunpack.c.0.s8 %v1024
    %v1026 = vlaneseq
    %v1027 = vshrl.u32 %v1026, 7
    %v1028 = vsub.s32 %v1025, %v1027
    %v1029 = vrot.slane %v1021, %v1028
    %v1031 = vunpack.c.l.s4 1983009808
    %v1032 = vunpack.c.0.s8 %v1031
    %v1033 = vlaneseq
    %v1034 = vshrl.u32 %v1033, 7
    %v1035 = vsub.s32 %v1032, %v1034
    %v1036 = vrot.slane %v1022, %v1035
    %v1037 = vcombine.low %v1029, %v1036
    %v1038 = vcombine.high %v1029, %v1036
    %v1041 = vadd.f32 %v1037, %v1038
    %1042 = vadd.xlane.f32.xlu0 %v1041
    %v1043 = vpop.xlane.xlu0 %1042
    %v1044 = vadd.f32 %v995, %v1043
    %s1045 = scalar_lea.vmem [#allocation6], 12
    %v1046 = vld [vmem:[%s1045] sm:$0xf]
    %v1047 = vld [vmem:[%s1045 + $0x30] sm:$0xf]
    %v1048 = vld [vmem:[%s1045 + $0x60] sm:$0xf]
    %v1049 = vld [vmem:[%s1045 + $0x90] sm:$0xf]
    %v1050 = vsub.f32 %v419, %v1046
    %v1051 = vsub.f32 %v420, %v1047
    %v1052 = vsub.f32 %v421, %v1048
    %v1053 = vsub.f32 %v422, %v1049
    %v1054 = vand.u32 2147483647, %v1050
    %v1055 = vand.u32 2147483647, %v1051
    %v1056 = vand.u32 2147483647, %v1052
    %v1057 = vand.u32 2147483647, %v1053
    %v1058 = vadd.f32 %v1054, 1e-06
    %v1059 = vadd.f32 %v1055, 1e-06
    %v1060 = vadd.f32 %v1056, 1e-06
    %v1061 = vadd.f32 %v1057, 1e-06
    %v1062 = vmul.f32 %v1058, %v1058
    %v1063 = vmul.f32 %v1059, %v1059
    %v1064 = vmul.f32 %v1060, %v1060
    %v1065 = vmul.f32 %v1061, %v1061
    %v1070 = vcombine.low %v1062, %v1063
    %v1071 = vcombine.low %v1064, %v1065
    %v1073 = vunpack.c.l.s4 1983009808
    %v1074 = vunpack.c.0.s8 %v1073
    %v1075 = vlaneseq
    %v1076 = vshrl.u32 %v1075, 7
    %v1077 = vsub.s32 %v1074, %v1076
    %v1078 = vrot.slane %v1070, %v1077
    %v1080 = vunpack.c.l.s4 1983009808
    %v1081 = vunpack.c.0.s8 %v1080
    %v1082 = vlaneseq
    %v1083 = vshrl.u32 %v1082, 7
    %v1084 = vsub.s32 %v1081, %v1083
    %v1085 = vrot.slane %v1071, %v1084
    %v1086 = vcombine.low %v1078, %v1085
    %v1087 = vcombine.high %v1078, %v1085
    %v1090 = vadd.f32 %v1086, %v1087
    %1091 = vadd.xlane.f32.xlu0 %v1090
    %v1092 = vpop.xlane.xlu0 %1091
    %v1093 = vadd.f32 %v1044, %v1092
    %s1094 = scalar_lea.vmem [#allocation6], 16
    %v1095 = vld [vmem:[%s1094] sm:$0xf]
    %v1096 = vld [vmem:[%s1094 + $0x30] sm:$0xf]
    %v1097 = vld [vmem:[%s1094 + $0x60] sm:$0xf]
    %v1098 = vld [vmem:[%s1094 + $0x90] sm:$0xf]
    %v1099 = vsub.f32 %v473, %v1095
    %v1100 = vsub.f32 %v474, %v1096
    %v1101 = vsub.f32 %v475, %v1097
    %v1102 = vsub.f32 %v476, %v1098
    %v1103 = vand.u32 2147483647, %v1099
    %v1104 = vand.u32 2147483647, %v1100
    %v1105 = vand.u32 2147483647, %v1101
    %v1106 = vand.u32 2147483647, %v1102
    %v1107 = vadd.f32 %v1103, 1e-06
    %v1108 = vadd.f32 %v1104, 1e-06
    %v1109 = vadd.f32 %v1105, 1e-06
    %v1110 = vadd.f32 %v1106, 1e-06
    %v1111 = vmul.f32 %v1107, %v1107
    %v1112 = vmul.f32 %v1108, %v1108
    %v1113 = vmul.f32 %v1109, %v1109
    %v1114 = vmul.f32 %v1110, %v1110
    %v1119 = vcombine.low %v1111, %v1112
    %v1120 = vcombine.low %v1113, %v1114
    %v1122 = vunpack.c.l.s4 1983009808
    %v1123 = vunpack.c.0.s8 %v1122
    %v1124 = vlaneseq
    %v1125 = vshrl.u32 %v1124, 7
    %v1126 = vsub.s32 %v1123, %v1125
    %v1127 = vrot.slane %v1119, %v1126
    %v1129 = vunpack.c.l.s4 1983009808
    %v1130 = vunpack.c.0.s8 %v1129
    %v1131 = vlaneseq
    %v1132 = vshrl.u32 %v1131, 7
    %v1133 = vsub.s32 %v1130, %v1132
    %v1134 = vrot.slane %v1120, %v1133
    %v1135 = vcombine.low %v1127, %v1134
    %v1136 = vcombine.high %v1127, %v1134
    %v1139 = vadd.f32 %v1135, %v1136
    %1140 = vadd.xlane.f32.xlu0 %v1139
    %v1141 = vpop.xlane.xlu0 %1140
    %v1142 = vadd.f32 %v1093, %v1141
    %s1143 = scalar_lea.vmem [#allocation6], 20
    %v1144 = vld [vmem:[%s1143] sm:$0xf]
    %v1145 = vld [vmem:[%s1143 + $0x30] sm:$0xf]
    %v1146 = vld [vmem:[%s1143 + $0x60] sm:$0xf]
    %v1147 = vld [vmem:[%s1143 + $0x90] sm:$0xf]
    %v1148 = vsub.f32 %v527, %v1144
    %v1149 = vsub.f32 %v528, %v1145
    %v1150 = vsub.f32 %v529, %v1146
    %v1151 = vsub.f32 %v530, %v1147
    %v1152 = vand.u32 2147483647, %v1148
    %v1153 = vand.u32 2147483647, %v1149
    %v1154 = vand.u32 2147483647, %v1150
    %v1155 = vand.u32 2147483647, %v1151
    %v1156 = vadd.f32 %v1152, 1e-06
    %v1157 = vadd.f32 %v1153, 1e-06
    %v1158 = vadd.f32 %v1154, 1e-06
    %v1159 = vadd.f32 %v1155, 1e-06
    %v1160 = vmul.f32 %v1156, %v1156
    %v1161 = vmul.f32 %v1157, %v1157
    %v1162 = vmul.f32 %v1158, %v1158
    %v1163 = vmul.f32 %v1159, %v1159
    %v1168 = vcombine.low %v1160, %v1161
    %v1169 = vcombine.low %v1162, %v1163
    %v1171 = vunpack.c.l.s4 1983009808
    %v1172 = vunpack.c.0.s8 %v1171
    %v1173 = vlaneseq
    %v1174 = vshrl.u32 %v1173, 7
    %v1175 = vsub.s32 %v1172, %v1174
    %v1176 = vrot.slane %v1168, %v1175
    %v1178 = vunpack.c.l.s4 1983009808
    %v1179 = vunpack.c.0.s8 %v1178
    %v1180 = vlaneseq
    %v1181 = vshrl.u32 %v1180, 7
    %v1182 = vsub.s32 %v1179, %v1181
    %v1183 = vrot.slane %v1169, %v1182
    %v1184 = vcombine.low %v1176, %v1183
    %v1185 = vcombine.high %v1176, %v1183
    %v1188 = vadd.f32 %v1184, %v1185
    %1189 = vadd.xlane.f32.xlu0 %v1188
    %v1190 = vpop.xlane.xlu0 %1189
    %v1191 = vadd.f32 %v1142, %v1190
    %s1192 = scalar_lea.vmem [#allocation6], 24
    %v1193 = vld [vmem:[%s1192] sm:$0xf]
    %v1194 = vld [vmem:[%s1192 + $0x30] sm:$0xf]
    %v1195 = vld [vmem:[%s1192 + $0x60] sm:$0xf]
    %v1196 = vld [vmem:[%s1192 + $0x90] sm:$0xf]
    %v1197 = vsub.f32 %v581, %v1193
    %v1198 = vsub.f32 %v582, %v1194
    %v1199 = vsub.f32 %v583, %v1195
    %v1200 = vsub.f32 %v584, %v1196
    %v1201 = vand.u32 2147483647, %v1197
    %v1202 = vand.u32 2147483647, %v1198
    %v1203 = vand.u32 2147483647, %v1199
    %v1204 = vand.u32 2147483647, %v1200
    %v1205 = vadd.f32 %v1201, 1e-06
    %v1206 = vadd.f32 %v1202, 1e-06
    %v1207 = vadd.f32 %v1203, 1e-06
    %v1208 = vadd.f32 %v1204, 1e-06
    %v1209 = vmul.f32 %v1205, %v1205
    %v1210 = vmul.f32 %v1206, %v1206
    %v1211 = vmul.f32 %v1207, %v1207
    %v1212 = vmul.f32 %v1208, %v1208
    %v1217 = vcombine.low %v1209, %v1210
    %v1218 = vcombine.low %v1211, %v1212
    %v1220 = vunpack.c.l.s4 1983009808
    %v1221 = vunpack.c.0.s8 %v1220
    %v1222 = vlaneseq
    %v1223 = vshrl.u32 %v1222, 7
    %v1224 = vsub.s32 %v1221, %v1223
    %v1225 = vrot.slane %v1217, %v1224
    %v1227 = vunpack.c.l.s4 1983009808
    %v1228 = vunpack.c.0.s8 %v1227
    %v1229 = vlaneseq
    %v1230 = vshrl.u32 %v1229, 7
    %v1231 = vsub.s32 %v1228, %v1230
    %v1232 = vrot.slane %v1218, %v1231
    %v1233 = vcombine.low %v1225, %v1232
    %v1234 = vcombine.high %v1225, %v1232
    %v1237 = vadd.f32 %v1233, %v1234
    %1238 = vadd.xlane.f32.xlu0 %v1237
    %v1239 = vpop.xlane.xlu0 %1238
    %v1240 = vadd.f32 %v1191, %v1239
    %s1241 = scalar_lea.vmem [#allocation6], 28
    %v1242 = vld [vmem:[%s1241] sm:$0xf]
    %v1243 = vld [vmem:[%s1241 + $0x30] sm:$0xf]
    %v1244 = vld [vmem:[%s1241 + $0x60] sm:$0xf]
    %v1245 = vld [vmem:[%s1241 + $0x90] sm:$0xf]
    %v1246 = vsub.f32 %v635, %v1242
    %v1247 = vsub.f32 %v636, %v1243
    %v1248 = vsub.f32 %v637, %v1244
    %v1249 = vsub.f32 %v638, %v1245
    %v1250 = vand.u32 2147483647, %v1246
    %v1251 = vand.u32 2147483647, %v1247
    %v1252 = vand.u32 2147483647, %v1248
    %v1253 = vand.u32 2147483647, %v1249
    %v1254 = vadd.f32 %v1250, 1e-06
    %v1255 = vadd.f32 %v1251, 1e-06
    %v1256 = vadd.f32 %v1252, 1e-06
    %v1257 = vadd.f32 %v1253, 1e-06
    %v1258 = vmul.f32 %v1254, %v1254
    %v1259 = vmul.f32 %v1255, %v1255
    %v1260 = vmul.f32 %v1256, %v1256
    %v1261 = vmul.f32 %v1257, %v1257
    %v1266 = vcombine.low %v1258, %v1259
    %v1267 = vcombine.low %v1260, %v1261
    %v1269 = vunpack.c.l.s4 1983009808
    %v1270 = vunpack.c.0.s8 %v1269
    %v1271 = vlaneseq
    %v1272 = vshrl.u32 %v1271, 7
    %v1273 = vsub.s32 %v1270, %v1272
    %v1274 = vrot.slane %v1266, %v1273
    %v1276 = vunpack.c.l.s4 1983009808
    %v1277 = vunpack.c.0.s8 %v1276
    %v1278 = vlaneseq
    %v1279 = vshrl.u32 %v1278, 7
    %v1280 = vsub.s32 %v1277, %v1279
    %v1281 = vrot.slane %v1267, %v1280
    %v1282 = vcombine.low %v1274, %v1281
    %v1283 = vcombine.high %v1274, %v1281
    %v1286 = vadd.f32 %v1282, %v1283
    %1287 = vadd.xlane.f32.xlu0 %v1286
    %v1288 = vpop.xlane.xlu0 %1287
    %v1289 = vadd.f32 %v1240, %v1288
    %s1290 = scalar_lea.vmem [#allocation6], 32
    %v1291 = vld [vmem:[%s1290] sm:$0xf]
    %v1292 = vld [vmem:[%s1290 + $0x30] sm:$0xf]
    %v1293 = vld [vmem:[%s1290 + $0x60] sm:$0xf]
    %v1294 = vld [vmem:[%s1290 + $0x90] sm:$0xf]
    %v1295 = vsub.f32 %v689, %v1291
    %v1296 = vsub.f32 %v690, %v1292
    %v1297 = vsub.f32 %v691, %v1293
    %v1298 = vsub.f32 %v692, %v1294
    %v1299 = vand.u32 2147483647, %v1295
    %v1300 = vand.u32 2147483647, %v1296
    %v1301 = vand.u32 2147483647, %v1297
    %v1302 = vand.u32 2147483647, %v1298
    %v1303 = vadd.f32 %v1299, 1e-06
    %v1304 = vadd.f32 %v1300, 1e-06
    %v1305 = vadd.f32 %v1301, 1e-06
    %v1306 = vadd.f32 %v1302, 1e-06
    %v1307 = vmul.f32 %v1303, %v1303
    %v1308 = vmul.f32 %v1304, %v1304
    %v1309 = vmul.f32 %v1305, %v1305
    %v1310 = vmul.f32 %v1306, %v1306
    %v1315 = vcombine.low %v1307, %v1308
    %v1316 = vcombine.low %v1309, %v1310
    %v1318 = vunpack.c.l.s4 1983009808
    %v1319 = vunpack.c.0.s8 %v1318
    %v1320 = vlaneseq
    %v1321 = vshrl.u32 %v1320, 7
    %v1322 = vsub.s32 %v1319, %v1321
    %v1323 = vrot.slane %v1315, %v1322
    %v1325 = vunpack.c.l.s4 1983009808
    %v1326 = vunpack.c.0.s8 %v1325
    %v1327 = vlaneseq
    %v1328 = vshrl.u32 %v1327, 7
    %v1329 = vsub.s32 %v1326, %v1328
    %v1330 = vrot.slane %v1316, %v1329
    %v1331 = vcombine.low %v1323, %v1330
    %v1332 = vcombine.high %v1323, %v1330
    %v1335 = vadd.f32 %v1331, %v1332
    %1336 = vadd.xlane.f32.xlu0 %v1335
    %v1337 = vpop.xlane.xlu0 %1336
    %v1338 = vadd.f32 %v1289, %v1337
    %s1339 = scalar_lea.vmem [#allocation6], 36
    %v1340 = vld [vmem:[%s1339] sm:$0xf]
    %v1341 = vld [vmem:[%s1339 + $0x30] sm:$0xf]
    %v1342 = vld [vmem:[%s1339 + $0x60] sm:$0xf]
    %v1343 = vld [vmem:[%s1339 + $0x90] sm:$0xf]
    %v1344 = vsub.f32 %v743, %v1340
    %v1345 = vsub.f32 %v744, %v1341
    %v1346 = vsub.f32 %v745, %v1342
    %v1347 = vsub.f32 %v746, %v1343
    %v1348 = vand.u32 2147483647, %v1344
    %v1349 = vand.u32 2147483647, %v1345
    %v1350 = vand.u32 2147483647, %v1346
    %v1351 = vand.u32 2147483647, %v1347
    %v1352 = vadd.f32 %v1348, 1e-06
    %v1353 = vadd.f32 %v1349, 1e-06
    %v1354 = vadd.f32 %v1350, 1e-06
    %v1355 = vadd.f32 %v1351, 1e-06
    %v1356 = vmul.f32 %v1352, %v1352
    %v1357 = vmul.f32 %v1353, %v1353
    %v1358 = vmul.f32 %v1354, %v1354
    %v1359 = vmul.f32 %v1355, %v1355
    %v1364 = vcombine.low %v1356, %v1357
    %v1365 = vcombine.low %v1358, %v1359
    %v1367 = vunpack.c.l.s4 1983009808
    %v1368 = vunpack.c.0.s8 %v1367
    %v1369 = vlaneseq
    %v1370 = vshrl.u32 %v1369, 7
    %v1371 = vsub.s32 %v1368, %v1370
    %v1372 = vrot.slane %v1364, %v1371
    %v1374 = vunpack.c.l.s4 1983009808
    %v1375 = vunpack.c.0.s8 %v1374
    %v1376 = vlaneseq
    %v1377 = vshrl.u32 %v1376, 7
    %v1378 = vsub.s32 %v1375, %v1377
    %v1379 = vrot.slane %v1365, %v1378
    %v1380 = vcombine.low %v1372, %v1379
    %v1381 = vcombine.high %v1372, %v1379
    %v1384 = vadd.f32 %v1380, %v1381
    %1385 = vadd.xlane.f32.xlu0 %v1384
    %v1386 = vpop.xlane.xlu0 %1385
    %v1387 = vadd.f32 %v1338, %v1386
    %s1388 = scalar_lea.vmem [#allocation6], 40
    %v1389 = vld [vmem:[%s1388] sm:$0xf]
    %v1390 = vld [vmem:[%s1388 + $0x30] sm:$0xf]
    %v1391 = vld [vmem:[%s1388 + $0x60] sm:$0xf]
    %v1392 = vld [vmem:[%s1388 + $0x90] sm:$0xf]
    %v1393 = vsub.f32 %v797, %v1389
    %v1394 = vsub.f32 %v798, %v1390
    %v1395 = vsub.f32 %v799, %v1391
    %v1396 = vsub.f32 %v800, %v1392
    %v1397 = vand.u32 2147483647, %v1393
    %v1398 = vand.u32 2147483647, %v1394
    %v1399 = vand.u32 2147483647, %v1395
    %v1400 = vand.u32 2147483647, %v1396
    %v1401 = vadd.f32 %v1397, 1e-06
    %v1402 = vadd.f32 %v1398, 1e-06
    %v1403 = vadd.f32 %v1399, 1e-06
    %v1404 = vadd.f32 %v1400, 1e-06
    %v1405 = vmul.f32 %v1401, %v1401
    %v1406 = vmul.f32 %v1402, %v1402
    %v1407 = vmul.f32 %v1403, %v1403
    %v1408 = vmul.f32 %v1404, %v1404
    %v1413 = vcombine.low %v1405, %v1406
    %v1414 = vcombine.low %v1407, %v1408
    %v1416 = vunpack.c.l.s4 1983009808
    %v1417 = vunpack.c.0.s8 %v1416
    %v1418 = vlaneseq
    %v1419 = vshrl.u32 %v1418, 7
    %v1420 = vsub.s32 %v1417, %v1419
    %v1421 = vrot.slane %v1413, %v1420
    %v1423 = vunpack.c.l.s4 1983009808
    %v1424 = vunpack.c.0.s8 %v1423
    %v1425 = vlaneseq
    %v1426 = vshrl.u32 %v1425, 7
    %v1427 = vsub.s32 %v1424, %v1426
    %v1428 = vrot.slane %v1414, %v1427
    %v1429 = vcombine.low %v1421, %v1428
    %v1430 = vcombine.high %v1421, %v1428
    %v1433 = vadd.f32 %v1429, %v1430
    %1434 = vadd.xlane.f32.xlu0 %v1433
    %v1435 = vpop.xlane.xlu0 %1434
    %v1436 = vadd.f32 %v1387, %v1435
    %s1437 = scalar_lea.vmem [#allocation6], 44
    %v1438 = vld [vmem:[%s1437] sm:$0xf]
    %v1439 = vld [vmem:[%s1437 + $0x30] sm:$0xf]
    %v1440 = vld [vmem:[%s1437 + $0x60] sm:$0xf]
    %v1441 = vld [vmem:[%s1437 + $0x90] sm:$0xf]
    %v1442 = vsub.f32 %v851, %v1438
    %v1443 = vsub.f32 %v852, %v1439
    %v1444 = vsub.f32 %v853, %v1440
    %v1445 = vsub.f32 %v854, %v1441
    %v1446 = vand.u32 2147483647, %v1442
    %v1447 = vand.u32 2147483647, %v1443
    %v1448 = vand.u32 2147483647, %v1444
    %v1449 = vand.u32 2147483647, %v1445
    %v1450 = vadd.f32 %v1446, 1e-06
    %v1451 = vadd.f32 %v1447, 1e-06
    %v1452 = vadd.f32 %v1448, 1e-06
    %v1453 = vadd.f32 %v1449, 1e-06
    %v1454 = vmul.f32 %v1450, %v1450
    %v1455 = vmul.f32 %v1451, %v1451
    %v1456 = vmul.f32 %v1452, %v1452
    %v1457 = vmul.f32 %v1453, %v1453
    %v1462 = vcombine.low %v1454, %v1455
    %v1463 = vcombine.low %v1456, %v1457
    %v1465 = vunpack.c.l.s4 1983009808
    %v1466 = vunpack.c.0.s8 %v1465
    %v1467 = vlaneseq
    %v1468 = vshrl.u32 %v1467, 7
    %v1469 = vsub.s32 %v1466, %v1468
    %v1470 = vrot.slane %v1462, %v1469
    %v1472 = vunpack.c.l.s4 1983009808
    %v1473 = vunpack.c.0.s8 %v1472
    %v1474 = vlaneseq
    %v1475 = vshrl.u32 %v1474, 7
    %v1476 = vsub.s32 %v1473, %v1475
    %v1477 = vrot.slane %v1463, %v1476
    %v1478 = vcombine.low %v1470, %v1477
    %v1479 = vcombine.high %v1470, %v1477
    %v1482 = vadd.f32 %v1478, %v1479
    %1483 = vadd.xlane.f32.xlu0 %v1482
    %v1484 = vpop.xlane.xlu0 %1483
    %v1485 = vadd.f32 %v1436, %v1484
    %v1486 = vmul.f32 %v1485, 0.01
    %v1487 = vld [vmem:[%s208] sm:$0xff]
    %v1488 = vld [vmem:[%s224] sm:$0xff]
    %v1489 = vld [vmem:[%s240] sm:$0xff]
    %v1490 = vsub.f32 %v1487, %v1489
    %v1491 = vand.u32 2147483647, %v1490
    %v1492 = vadd.f32 %v1491, 1e-06
    %v1493 = vsub.f32 %v1488, %v1489
    %v1494 = vand.u32 2147483647, %v1493
    %v1495 = vadd.f32 %v1494, 1e-06
    %v1496 = vmul.f32 %v1492, %v1492
    %vm1497 = vcmask 261120
    %v1498 = vsel %vm1497, %v1496, 0.0
    %1499 = vadd.xlane.f32.xlu0 %v1498
    %v1500 = vpop.xlane.xlu0 %1499
    %v1501 = vmul.f32 %v1495, %v1495
    %v1502 = vsel %vm1497, %v1501, 0.0
    %1503 = vadd.xlane.f32.xlu0 %v1502
    %v1504 = vpop.xlane.xlu0 %1503
    %v1505 = vadd.f32 %v898, 0.5
    %v1506 = vlog2.pop %v1505
    %v1507 = vmul.f32 %v1506, 0.6931472
    %v1508 = vadd.f32 %v1486, 0.5
    %v1509 = vlog2.pop %v1508
    %v1510 = vmul.f32 %v1509, 0.6931472
    %v1511 = vadd.f32 %v1510, 1.0
    %v1512 = vadd.f32 %v1500, 0.5
    %v1513 = vlog2.pop %v1512
    %v1514 = vmul.f32 %v1513, 0.6931472
    %v1515 = vadd.f32 %v1504, 0.5
    %v1516 = vlog2.pop %v1515
    %v1517 = vmul.f32 %v1516, 0.6931472
    %v1518 = vadd.f32 %v1517, 1.0
    %v1519 = vsub.f32 %v1518, 0.5
    %v1520 = vsub.f32 %v1519, %v1514
    %v1521 = vmax.f32 %v1520, 0.0
    %v1522 = vadd.f32 %v1507, %v1511
    %v1523 = vadd.f32 %v1522, %v1521
    %s1524 = sadd.s32 0, 0
    %s1525 = smul.u32 %s1524, 8
    %v1526 = vlaneseq
    %v1527 = vshrl.u32 %v1526, 7
    %v1528 = vstv %s1525
    %v1529 = vadd.s32 %v1528, %v1527
    %vm1530 = vcmp.lt.s32.totalorder %v1529, 2
    %v1531 = vsel %vm1530, %v1523, 0.0
    %v1532 = vld [vmem:[%s6] sm:$0xff]
    %v1533 = vadd.f32 %v1532, %v1531
    %vm1534 = vcmask 7168
    %1535 = vst.msk [vmem:[%s6] sm:$0xff] %vm1534, %v1533
    // Predicated region
    $region42: #{tpu_custom_call.1} parent=1 // pred_check
      _
    $region43: #{tpu_custom_call.1} parent=1 // pred_check_branch
      %1537 = sbr.rel (0) target = $region45
    $region44: #{tpu_custom_call.1} parent=1 // pred_region
      _
    $region45: #{tpu_custom_call.1} parent=1 // pred_fallthru
      _
    // Predicated region
    $region46: #{tpu_custom_call.1} parent=1 // pred_check
      _
    $region47: #{tpu_custom_call.1} parent=1 // pred_check_branch
      %1539 = sbr.rel (0) target = $region49
    $region48: #{tpu_custom_call.1} parent=1 // pred_region
      _
    $region49: #{tpu_custom_call.1} parent=1 // pred_fallthru
      _
    %1540 = vsyncpa [#allocation3], 1
    %1541 = vsyncpa [#allocation5], 1

</llo_original>
